<compile_context>
chip_gen: v5e
topology: v5e:2x2
jax: 0.10.0
libtpu: 0.0.40
codegen_flags: <defaults>
</compile_context>

<pallas_src>
import jax
import jax.numpy as jnp
from jax import lax
from jax.experimental import pallas as pl
from jax.experimental.pallas import tpu as pltpu

# ---- small, deterministic problem sizes consistent with the module ----------
S = 8                      # number of support (user,item) pairs == LSTM seq len
D = 32                     # embedding dim / LSTM input size
H = 32                     # LSTM hidden size
LAYER_NUM = 2
NUM_USERS = 16
NUM_ITEMS = 16
H2 = 2 * H                 # 64  : bidirectional hidden concat width
G = 4 * H2                 # 256 : packed gate width  [i_f,i_b,f_f,f_b,g_f,g_b,o_f,o_b]
ATTN_OUT = LAYER_NUM * 2 * D          # 128 per head
ATTN2 = 2 * ATTN_OUT                  # 256 : user+item heads packed
NTBL = NUM_USERS + NUM_ITEMS          # stacked (user|item) projected table rows


# -----------------------------------------------------------------------------
# Single fused kernel (one task / grid step)
# -----------------------------------------------------------------------------
def conet_meta_kernel(ids_ref,                      # (1, S, 2) int32; col 1 pre-offset by NUM_USERS
                      tbl_ref,                      # (NTBL, D) pre-projected tables (bias folded)
                      lng_ref, lnb_ref,             # (1, D) LayerNorm gamma / beta
                      wih_ref, whh_ref, blstm_ref,  # (D, G), (2H, G), (1, G) packed bi-LSTM
                      wattn_ref, battn_ref,         # (2H, ATTN2), (1, ATTN2) packed attn heads
                      out_ref):                     # (1, 1, ATTN2)
    # ---- 1) one-hot matmul gather fused with the pre-folded projection -----
    ids = ids_ref[0]                                               # (S, 2)
    lane = lax.broadcasted_iota(jnp.int32, (S, NTBL), 1)
    onehot = ((lane == ids[:, 0:1]) | (lane == ids[:, 1:2])).astype(jnp.float32)
    y = jnp.dot(onehot, tbl_ref[...],
                preferred_element_type=jnp.float32)                # (S, D) pre-LN activation

    # ---- 2) LayerNorm (one-pass variance, gamma folded into scale) + ReLU --
    mean = jnp.mean(y, axis=-1, keepdims=True)
    var = jnp.maximum(jnp.mean(y * y, axis=-1, keepdims=True) - mean * mean, 0.0)
    scale = lng_ref[...] * lax.rsqrt(var + 1e-5)
    x = jnp.maximum((y - mean) * scale + lnb_ref[...], 0.0)        # (S, D)

    # ---- 3) bidirectional LSTM, both directions in one recurrence ----------
    # Hoisted input-to-hidden matmul for all timesteps & both directions.
    zx = jnp.dot(x, wih_ref[...], preferred_element_type=jnp.float32)   # (S, G)

    # Time-reverse for the backward direction as a tiny anti-diagonal matmul
    # (MXU slot, off the serial chain), then one full-width select + bias add
    # BEFORE the loop -> no per-step selects / row loads on the h-chain.
    rev = ((lax.broadcasted_iota(jnp.int32, (S, S), 0)
            + lax.broadcasted_iota(jnp.int32, (S, S), 1)) == (S - 1)).astype(jnp.float32)
    zx_rev = jnp.dot(rev, zx, preferred_element_type=jnp.float32)       # (S, G)

    lane_g = lax.broadcasted_iota(jnp.int32, (S, G), 1)
    fwd_lane = (lane_g % H2) < H                                    # forward-direction lanes
    zsel = jnp.where(fwd_lane, zx, zx_rev) + blstm_ref[...]         # (S, G)

    go_is_g = lax.broadcasted_iota(jnp.int32, (1, 2 * H2), 1) < H2  # g-block of the [g|o] vreg

    whh = whh_ref[...]                                              # (2H, G)
    h = jnp.zeros((1, H2), jnp.float32)                             # [h_f | h_b]
    c = jnp.zeros((1, H2), jnp.float32)                             # [c_f | c_b]

    # Fully-unrolled 8-step recurrence: only h @ whh + gate math stay on the
    # serial chain.  EUP work per step: sigmoid(128) + tanh/sigmoid(128) + tanh(64).
    for t in range(S):
        z = zsel[t:t + 1, :] + jnp.dot(h, whh,
                                       preferred_element_type=jnp.float32)   # (1, G)
        if_act = jax.nn.sigmoid(z[:, :2 * H2])                      # [i_f,i_b | f_f,f_b]
        z_go = z[:, 2 * H2:]                                        # [g_f,g_b | o_f,o_b]
        go_act = jnp.where(go_is_g, jnp.tanh(z_go), jax.nn.sigmoid(z_go))
        i_g = if_act[:, :H2]
        f_g = if_act[:, H2:]
        g_g = go_act[:, :H2]
        o_g = go_act[:, H2:]
        c = f_g * c + i_g * g_g
        h = o_g * jnp.tanh(c)

    # ---- 4) packed user/item attention heads: one (1,2H)x(2H,256) matmul ---
    out = jnp.dot(h, wattn_ref[...], preferred_element_type=jnp.float32) + battn_ref[...]
    out_ref[0] = out                                                # lane-dense (1, 256) store


# -----------------------------------------------------------------------------
# Wrapper: one pallas_call, grid over tasks, weights resident across the grid
# -----------------------------------------------------------------------------
def configure_model_forward(support_user_ids, support_item_ids, packed):
    """support_*_ids: (B, S) int32 — B independent support sets (tasks)."""
    B = support_user_ids.shape[0]
    ids = jnp.stack([support_user_ids.astype(jnp.int32),
                     support_item_ids.astype(jnp.int32) + NUM_USERS],
                    axis=-1)                                        # (B, S, 2)

    const = lambda b: (0, 0)        # weight blocks: same block every grid step
    out = pl.pallas_call(
        conet_meta_kernel,
        out_shape=jax.ShapeDtypeStruct((B, 1, ATTN2), jnp.float32),
        grid=(B,),
        in_specs=[
            pl.BlockSpec((1, S, 2), lambda b: (b, 0, 0)),           # per-task ids
            pl.BlockSpec((NTBL, D), const),                         # projected tables
            pl.BlockSpec((1, D), const),                            # ln_gamma
            pl.BlockSpec((1, D), const),                            # ln_beta
            pl.BlockSpec((D, G), const),                            # wih
            pl.BlockSpec((H2, G), const),                           # whh
            pl.BlockSpec((1, G), const),                            # b_lstm
            pl.BlockSpec((H2, ATTN2), const),                       # w_attn
            pl.BlockSpec((1, ATTN2), const),                        # b_attn
        ],
        out_specs=pl.BlockSpec((1, 1, ATTN2), lambda b: (b, 0, 0)),
        compiler_params=pltpu.CompilerParams(
            dimension_semantics=("parallel",)),
    )(ids,
      packed["table_proj"],
      packed["ln_gamma"], packed["ln_beta"],
      packed["wih"], packed["whh"], packed["b_lstm"],
      packed["w_attn"], packed["b_attn"])

    out = out[:, 0, :]
    user_attn = out[:, :ATTN_OUT].reshape(B, LAYER_NUM, 2, D)
    item_attn = out[:, ATTN_OUT:].reshape(B, LAYER_NUM, 2, D)
    return user_attn, item_attn


# -----------------------------------------------------------------------------
# Parameters: PyTorch-convention shapes, then packed into the kernel layout
# -----------------------------------------------------------------------------
def make_params(key):
    ks = jax.random.split(key, 20)
    s = 0.1
    n = jax.random.normal
    return {
        "user_table": n(ks[0], (NUM_USERS, D), jnp.float32) * s,
        "item_table": n(ks[1], (NUM_ITEMS, D), jnp.float32) * s,
        # support_proj MLP: Linear(2D -> D) + LayerNorm(D)
        "proj_w": n(ks[2], (D, 2 * D), jnp.float32) * s,     # (out, in)
        "proj_b": n(ks[3], (D,), jnp.float32) * s,
        "ln_gamma": jnp.ones((D,), jnp.float32),
        "ln_beta": jnp.zeros((D,), jnp.float32),
        # PyTorch LSTM params (gate row order i,f,g,o), fwd + reverse dirs
        "wih_f": n(ks[4], (4 * H, D), jnp.float32) * s,
        "whh_f": n(ks[5], (4 * H, H), jnp.float32) * s,
        "bih_f": n(ks[6], (4 * H,), jnp.float32) * s,
        "bhh_f": n(ks[7], (4 * H,), jnp.float32) * s,
        "wih_b": n(ks[8], (4 * H, D), jnp.float32) * s,
        "whh_b": n(ks[9], (4 * H, H), jnp.float32) * s,
        "bih_b": n(ks[10], (4 * H,), jnp.float32) * s,
        "bhh_b": n(ks[11], (4 * H,), jnp.float32) * s,
        # attention-head linears: Linear(2H -> layer_num*2*D)
        "w_user": n(ks[12], (ATTN_OUT, H2), jnp.float32) * s,
        "b_user": n(ks[13], (ATTN_OUT,), jnp.float32) * s,
        "w_item": n(ks[14], (ATTN_OUT, H2), jnp.float32) * s,
        "b_item": n(ks[15], (ATTN_OUT,), jnp.float32) * s,
    }


def pack_params(p):
    """One-time weight packing into the fused-kernel layout."""
    def pack_gates(mf, mb):
        # mf/mb: (in, 4H) with column gate blocks [i,f,g,o]; interleave to
        # column layout [i_f, i_b, f_f, f_b, g_f, g_b, o_f, o_b]  -> (in, 8H)
        rows = mf.shape[0]
        a = mf.reshape(rows, 4, H)
        b = mb.reshape(rows, 4, H)
        return jnp.stack([a, b], axis=2).reshape(rows, 4 * 2 * H)

    zeros_hh = jnp.zeros((H, 4 * H), jnp.float32)
    wih = pack_gates(p["wih_f"].T, p["wih_b"].T)                       # (D, 8H)
    whh = jnp.concatenate([pack_gates(p["whh_f"].T, zeros_hh),         # h_f rows
                           pack_gates(zeros_hh, p["whh_b"].T)],        # h_b rows
                          axis=0)                                       # (2H, 8H)
    b_lstm = pack_gates((p["bih_f"] + p["bhh_f"]).reshape(1, 4 * H),
                        (p["bih_b"] + p["bhh_b"]).reshape(1, 4 * H))    # (1, 8H)

    # Fold the support projection Linear(2D->D) into the embedding tables
    # (Linear precedes LayerNorm, so the fold is exact).  The projection bias
    # is folded into the user half only: each support row sums exactly one
    # user row and one item row, so it is added exactly once.
    user_proj = p["user_table"] @ p["proj_w"][:, :D].T + p["proj_b"][None, :]
    item_proj = p["item_table"] @ p["proj_w"][:, D:].T
    table_proj = jnp.concatenate([user_proj, item_proj], axis=0)        # (NTBL, D)

    return {
        "table_proj": table_proj,
        "ln_gamma": p["ln_gamma"].reshape(1, D),
        "ln_beta": p["ln_beta"].reshape(1, D),
        "wih": wih, "whh": whh, "b_lstm": b_lstm,
        "w_attn": jnp.concatenate([p["w_user"].T, p["w_item"].T], axis=1),  # (2H, 256)
        "b_attn": jnp.concatenate([p["b_user"], p["b_item"]]).reshape(1, ATTN2),
    }


if __name__ == "__main__":
    key = jax.random.PRNGKey(0)
    params = make_params(key)
    packed = pack_params(params)          # one-time weight prep (outside kernel)

    B = 4                                 # tasks (support sets) per call
    support_user_ids = (jnp.arange(B * S, dtype=jnp.int32).reshape(B, S)) % NUM_USERS
    support_item_ids = (jnp.arange(B * S, dtype=jnp.int32).reshape(B, S) * 3) % NUM_ITEMS

    fwd = jax.jit(configure_model_forward)
    user_attn, item_attn = fwd(support_user_ids, support_item_ids, packed)
    jax.block_until_ready((user_attn, item_attn))

    assert user_attn.shape == (B, LAYER_NUM, 2, D)
    assert item_attn.shape == (B, LAYER_NUM, 2, D)
    assert bool(jnp.all(jnp.isfinite(user_attn))) and bool(jnp.all(jnp.isfinite(item_attn)))
    print("KERNEL_OK")
</pallas_src>

<mosaic_0001>
module attributes {stable_mosaic.version = 11 : i64} {
  func.func @conet_meta_kernel(%arg0: i32, %arg1: memref<1x8x2xi32, #tpu.memory_space<vmem>>, %arg2: memref<32x32xf32, #tpu.memory_space<vmem>>, %arg3: memref<1x32xf32, #tpu.memory_space<vmem>>, %arg4: memref<1x32xf32, #tpu.memory_space<vmem>>, %arg5: memref<32x256xf32, #tpu.memory_space<vmem>>, %arg6: memref<64x256xf32, #tpu.memory_space<vmem>>, %arg7: memref<1x256xf32, #tpu.memory_space<vmem>>, %arg8: memref<64x256xf32, #tpu.memory_space<vmem>>, %arg9: memref<1x256xf32, #tpu.memory_space<vmem>>, %arg10: memref<1x1x256xf32, #tpu.memory_space<vmem>>) attributes {dimension_semantics = [#tpu.dimension_semantics<parallel>], iteration_bounds = array<i64: 4>, scalar_prefetch = 0 : i64, scratch_operands = 0 : i64, tpu.core_type = #tpu.core_type<tc>, window_params = [{transform_indices = @transform_0, window_bounds = array<i64: 1, 8, 2>}, {pipeline_mode = #tpu.pipeline_mode<synchronous>, transform_indices = @transform_1, window_bounds = array<i64: 32, 32>}, {pipeline_mode = #tpu.pipeline_mode<synchronous>, transform_indices = @transform_2, window_bounds = array<i64: 1, 32>}, {pipeline_mode = #tpu.pipeline_mode<synchronous>, transform_indices = @transform_3, window_bounds = array<i64: 1, 32>}, {pipeline_mode = #tpu.pipeline_mode<synchronous>, transform_indices = @transform_4, window_bounds = array<i64: 32, 256>}, {pipeline_mode = #tpu.pipeline_mode<synchronous>, transform_indices = @transform_5, window_bounds = array<i64: 64, 256>}, {pipeline_mode = #tpu.pipeline_mode<synchronous>, transform_indices = @transform_6, window_bounds = array<i64: 1, 256>}, {pipeline_mode = #tpu.pipeline_mode<synchronous>, transform_indices = @transform_7, window_bounds = array<i64: 64, 256>}, {pipeline_mode = #tpu.pipeline_mode<synchronous>, transform_indices = @transform_8, window_bounds = array<i64: 1, 256>}, {transform_indices = @transform_9, window_bounds = array<i64: 1, 1, 256>}]} {
    %c0 = arith.constant 0 : index
    %c0_0 = arith.constant 0 : index
    %c0_1 = arith.constant 0 : index
    %0 = vector.load %arg1[%c0, %c0_0, %c0_1] : memref<1x8x2xi32, #tpu.memory_space<vmem>>, vector<1x8x2xi32>
    %1 = vector.shape_cast %0 : vector<1x8x2xi32> to vector<8x2xi32>
    %2 = tpu.iota {dimensions = array<i32: 1>} : vector<8x32xi32>
    %3 = vector.extract_strided_slice %1 {offsets = [0, 0], sizes = [8, 1], strides = [1, 1]} : vector<8x2xi32> to vector<8x1xi32>
    %4 = vector.broadcast %3 : vector<8x1xi32> to vector<8x32xi32>
    %5 = arith.cmpi eq, %2, %4 : vector<8x32xi32>
    %6 = vector.extract_strided_slice %1 {offsets = [0, 1], sizes = [8, 1], strides = [1, 1]} : vector<8x2xi32> to vector<8x1xi32>
    %7 = vector.broadcast %6 : vector<8x1xi32> to vector<8x32xi32>
    %8 = arith.cmpi eq, %2, %7 : vector<8x32xi32>
    %9 = arith.ori %5, %8 : vector<8x32xi1>
    %10 = arith.extui %9 : vector<8x32xi1> to vector<8x32xi32>
    %11 = arith.sitofp %10 : vector<8x32xi32> to vector<8x32xf32>
    %c0_2 = arith.constant 0 : index
    %c0_3 = arith.constant 0 : index
    %12 = vector.load %arg2[%c0_2, %c0_3] : memref<32x32xf32, #tpu.memory_space<vmem>>, vector<32x32xf32>
    %cst = arith.constant dense<0.000000e+00> : vector<8x32xf32>
    %13 = tpu.matmul %11, %12, %cst {dimension_numbers = #tpu.dot_dimension_numbers<[1], [0], [0], [1], [0, 0, 1, 1], [], []>} : vector<8x32xf32>, vector<32x32xf32>, vector<8x32xf32> -> vector<8x32xf32>
    %cst_4 = arith.constant dense<0.000000e+00> : vector<8xf32>
    %14 = vector.multi_reduction <add>, %13, %cst_4 [1] : vector<8x32xf32> to vector<8xf32>
    %15 = vector.shape_cast %14 : vector<8xf32> to vector<8x1xf32>
    %cst_5 = arith.constant 3.200000e+01 : f32
    %16 = vector.broadcast %cst_5 : f32 to vector<8x1xf32>
    %17 = arith.divf %15, %16 : vector<8x1xf32>
    %18 = arith.mulf %13, %13 : vector<8x32xf32>
    %cst_6 = arith.constant dense<0.000000e+00> : vector<8xf32>
    %19 = vector.multi_reduction <add>, %18, %cst_6 [1] : vector<8x32xf32> to vector<8xf32>
    %20 = vector.shape_cast %19 : vector<8xf32> to vector<8x1xf32>
    %cst_7 = arith.constant 3.200000e+01 : f32
    %21 = vector.broadcast %cst_7 : f32 to vector<8x1xf32>
    %22 = arith.divf %20, %21 : vector<8x1xf32>
    %23 = arith.mulf %17, %17 : vector<8x1xf32>
    %24 = arith.subf %22, %23 : vector<8x1xf32>
    %cst_8 = arith.constant 0.000000e+00 : f32
    %25 = vector.broadcast %cst_8 : f32 to vector<8x1xf32>
    %26 = arith.maximumf %24, %25 : vector<8x1xf32>
    %c0_9 = arith.constant 0 : index
    %c0_10 = arith.constant 0 : index
    %27 = vector.load %arg3[%c0_9, %c0_10] : memref<1x32xf32, #tpu.memory_space<vmem>>, vector<1x32xf32>
    %cst_11 = arith.constant 9.99999974E-6 : f32
    %28 = vector.broadcast %cst_11 : f32 to vector<8x1xf32>
    %29 = arith.addf %26, %28 : vector<8x1xf32>
    %30 = math.rsqrt %29 : vector<8x1xf32>
    %31 = vector.broadcast %27 : vector<1x32xf32> to vector<8x32xf32>
    %32 = vector.broadcast %30 : vector<8x1xf32> to vector<8x32xf32>
    %33 = arith.mulf %31, %32 : vector<8x32xf32>
    %34 = vector.broadcast %17 : vector<8x1xf32> to vector<8x32xf32>
    %35 = arith.subf %13, %34 : vector<8x32xf32>
    %36 = arith.mulf %35, %33 : vector<8x32xf32>
    %c0_12 = arith.constant 0 : index
    %c0_13 = arith.constant 0 : index
    %37 = vector.load %arg4[%c0_12, %c0_13] : memref<1x32xf32, #tpu.memory_space<vmem>>, vector<1x32xf32>
    %38 = vector.broadcast %37 : vector<1x32xf32> to vector<8x32xf32>
    %39 = arith.addf %36, %38 : vector<8x32xf32>
    %cst_14 = arith.constant 0.000000e+00 : f32
    %40 = vector.broadcast %cst_14 : f32 to vector<8x32xf32>
    %41 = arith.maximumf %39, %40 : vector<8x32xf32>
    %c0_15 = arith.constant 0 : index
    %c0_16 = arith.constant 0 : index
    %42 = vector.load %arg5[%c0_15, %c0_16] : memref<32x256xf32, #tpu.memory_space<vmem>>, vector<32x256xf32>
    %cst_17 = arith.constant dense<0.000000e+00> : vector<8x256xf32>
    %43 = tpu.matmul %41, %42, %cst_17 {dimension_numbers = #tpu.dot_dimension_numbers<[1], [0], [0], [1], [0, 0, 1, 1], [], []>} : vector<8x32xf32>, vector<32x256xf32>, vector<8x256xf32> -> vector<8x256xf32>
    %44 = tpu.iota {dimensions = array<i32: 0>} : vector<8x8xi32>
    %45 = tpu.iota {dimensions = array<i32: 1>} : vector<8x8xi32>
    %46 = arith.addi %44, %45 : vector<8x8xi32>
    %c7_i32 = arith.constant 7 : i32
    %47 = vector.broadcast %c7_i32 : i32 to vector<8x8xi32>
    %48 = arith.cmpi eq, %46, %47 : vector<8x8xi32>
    %49 = arith.extui %48 : vector<8x8xi1> to vector<8x8xi32>
    %50 = arith.sitofp %49 : vector<8x8xi32> to vector<8x8xf32>
    %cst_18 = arith.constant dense<0.000000e+00> : vector<8x256xf32>
    %51 = tpu.matmul %50, %43, %cst_18 {dimension_numbers = #tpu.dot_dimension_numbers<[1], [0], [0], [1], [0, 0, 1, 1], [], []>} : vector<8x8xf32>, vector<8x256xf32>, vector<8x256xf32> -> vector<8x256xf32>
    %52 = tpu.iota {dimensions = array<i32: 1>} : vector<8x256xi32>
    %c64_i32 = arith.constant 64 : i32
    %c0_i32 = arith.constant 0 : i32
    %53 = arith.cmpi eq, %c64_i32, %c0_i32 : i32
    %c1_i32 = arith.constant 1 : i32
    %54 = arith.select %53, %c1_i32, %c64_i32 : i32
    %55 = vector.broadcast %54 : i32 to vector<8x256xi32>
    %56 = arith.remsi %52, %55 : vector<8x256xi32>
    %c0_i32_19 = arith.constant 0 : i32
    %57 = vector.broadcast %c0_i32_19 : i32 to vector<8x256xi32>
    %58 = arith.cmpi ne, %56, %57 : vector<8x256xi32>
    %c0_i32_20 = arith.constant 0 : i32
    %59 = vector.broadcast %c0_i32_20 : i32 to vector<8x256xi32>
    %60 = arith.cmpi slt, %56, %59 : vector<8x256xi32>
    %c0_i32_21 = arith.constant 0 : i32
    %61 = arith.cmpi slt, %54, %c0_i32_21 : i32
    %62 = vector.broadcast %61 : i1 to vector<8x256xi1>
    %63 = vector.broadcast %62 : vector<8x256xi1> to vector<8x256xi1>
    %64 = arith.xori %60, %63 : vector<8x256xi1>
    %65 = arith.andi %64, %58 : vector<8x256xi1>
    %66 = vector.broadcast %54 : i32 to vector<8x256xi32>
    %67 = arith.addi %56, %66 : vector<8x256xi32>
    %68 = arith.select %65, %67, %56 : vector<8x256xi1>, vector<8x256xi32>
    %c32_i32 = arith.constant 32 : i32
    %69 = vector.broadcast %c32_i32 : i32 to vector<8x256xi32>
    %70 = arith.cmpi slt, %68, %69 : vector<8x256xi32>
    %71 = arith.select %70, %43, %51 : vector<8x256xi1>, vector<8x256xf32>
    %c0_22 = arith.constant 0 : index
    %c0_23 = arith.constant 0 : index
    %72 = vector.load %arg7[%c0_22, %c0_23] : memref<1x256xf32, #tpu.memory_space<vmem>>, vector<1x256xf32>
    %73 = vector.broadcast %72 : vector<1x256xf32> to vector<8x256xf32>
    %74 = arith.addf %71, %73 : vector<8x256xf32>
    %75 = tpu.iota {dimensions = array<i32: 1>} : vector<1x128xi32>
    %c64_i32_24 = arith.constant 64 : i32
    %76 = vector.broadcast %c64_i32_24 : i32 to vector<1x128xi32>
    %77 = arith.cmpi slt, %75, %76 : vector<1x128xi32>
    %c0_25 = arith.constant 0 : index
    %c0_26 = arith.constant 0 : index
    %78 = vector.load %arg6[%c0_25, %c0_26] : memref<64x256xf32, #tpu.memory_space<vmem>>, vector<64x256xf32>
    %cst_27 = arith.constant 0.000000e+00 : f32
    %79 = vector.broadcast %cst_27 : f32 to vector<1x64xf32>
    %cst_28 = arith.constant 0.000000e+00 : f32
    %80 = vector.broadcast %cst_28 : f32 to vector<1x64xf32>
    %81 = vector.extract_strided_slice %74 {offsets = [0, 0], sizes = [1, 256], strides = [1, 1]} : vector<8x256xf32> to vector<1x256xf32>
    %cst_29 = arith.constant dense<0.000000e+00> : vector<1x256xf32>
    %82 = tpu.matmul %79, %78, %cst_29 {dimension_numbers = #tpu.dot_dimension_numbers<[1], [0], [0], [1], [0, 0, 1, 1], [], []>} : vector<1x64xf32>, vector<64x256xf32>, vector<1x256xf32> -> vector<1x256xf32>
    %83 = arith.addf %81, %82 : vector<1x256xf32>
    %84 = vector.extract_strided_slice %83 {offsets = [0, 0], sizes = [1, 128], strides = [1, 1]} : vector<1x256xf32> to vector<1x128xf32>
    %85 = arith.negf %84 : vector<1x128xf32>
    %86 = math.exp %85 : vector<1x128xf32>
    %cst_30 = arith.constant 1.000000e+00 : f32
    %87 = vector.broadcast %cst_30 : f32 to vector<1x128xf32>
    %88 = arith.addf %87, %86 : vector<1x128xf32>
    %89 = arith.divf %87, %88 : vector<1x128xf32>
    %90 = vector.extract_strided_slice %83 {offsets = [0, 128], sizes = [1, 128], strides = [1, 1]} : vector<1x256xf32> to vector<1x128xf32>
    %91 = math.tanh %90 : vector<1x128xf32>
    %92 = arith.negf %90 : vector<1x128xf32>
    %93 = math.exp %92 : vector<1x128xf32>
    %cst_31 = arith.constant 1.000000e+00 : f32
    %94 = vector.broadcast %cst_31 : f32 to vector<1x128xf32>
    %95 = arith.addf %94, %93 : vector<1x128xf32>
    %96 = arith.divf %94, %95 : vector<1x128xf32>
    %97 = arith.select %77, %91, %96 : vector<1x128xi1>, vector<1x128xf32>
    %98 = vector.extract_strided_slice %89 {offsets = [0, 0], sizes = [1, 64], strides = [1, 1]} : vector<1x128xf32> to vector<1x64xf32>
    %99 = vector.extract_strided_slice %89 {offsets = [0, 64], sizes = [1, 64], strides = [1, 1]} : vector<1x128xf32> to vector<1x64xf32>
    %100 = vector.extract_strided_slice %97 {offsets = [0, 0], sizes = [1, 64], strides = [1, 1]} : vector<1x128xf32> to vector<1x64xf32>
    %101 = vector.extract_strided_slice %97 {offsets = [0, 64], sizes = [1, 64], strides = [1, 1]} : vector<1x128xf32> to vector<1x64xf32>
    %102 = arith.mulf %99, %80 : vector<1x64xf32>
    %103 = arith.mulf %98, %100 : vector<1x64xf32>
    %104 = arith.addf %102, %103 : vector<1x64xf32>
    %105 = math.tanh %104 : vector<1x64xf32>
    %106 = arith.mulf %101, %105 : vector<1x64xf32>
    %107 = vector.extract_strided_slice %74 {offsets = [1, 0], sizes = [1, 256], strides = [1, 1]} : vector<8x256xf32> to vector<1x256xf32>
    %cst_32 = arith.constant dense<0.000000e+00> : vector<1x256xf32>
    %108 = tpu.matmul %106, %78, %cst_32 {dimension_numbers = #tpu.dot_dimension_numbers<[1], [0], [0], [1], [0, 0, 1, 1], [], []>} : vector<1x64xf32>, vector<64x256xf32>, vector<1x256xf32> -> vector<1x256xf32>
    %109 = arith.addf %107, %108 : vector<1x256xf32>
    %110 = vector.extract_strided_slice %109 {offsets = [0, 0], sizes = [1, 128], strides = [1, 1]} : vector<1x256xf32> to vector<1x128xf32>
    %111 = arith.negf %110 : vector<1x128xf32>
    %112 = math.exp %111 : vector<1x128xf32>
    %cst_33 = arith.constant 1.000000e+00 : f32
    %113 = vector.broadcast %cst_33 : f32 to vector<1x128xf32>
    %114 = arith.addf %113, %112 : vector<1x128xf32>
    %115 = arith.divf %113, %114 : vector<1x128xf32>
    %116 = vector.extract_strided_slice %109 {offsets = [0, 128], sizes = [1, 128], strides = [1, 1]} : vector<1x256xf32> to vector<1x128xf32>
    %117 = math.tanh %116 : vector<1x128xf32>
    %118 = arith.negf %116 : vector<1x128xf32>
    %119 = math.exp %118 : vector<1x128xf32>
    %cst_34 = arith.constant 1.000000e+00 : f32
    %120 = vector.broadcast %cst_34 : f32 to vector<1x128xf32>
    %121 = arith.addf %120, %119 : vector<1x128xf32>
    %122 = arith.divf %120, %121 : vector<1x128xf32>
    %123 = arith.select %77, %117, %122 : vector<1x128xi1>, vector<1x128xf32>
    %124 = vector.extract_strided_slice %115 {offsets = [0, 0], sizes = [1, 64], strides = [1, 1]} : vector<1x128xf32> to vector<1x64xf32>
    %125 = vector.extract_strided_slice %115 {offsets = [0, 64], sizes = [1, 64], strides = [1, 1]} : vector<1x128xf32> to vector<1x64xf32>
    %126 = vector.extract_strided_slice %123 {offsets = [0, 0], sizes = [1, 64], strides = [1, 1]} : vector<1x128xf32> to vector<1x64xf32>
    %127 = vector.extract_strided_slice %123 {offsets = [0, 64], sizes = [1, 64], strides = [1, 1]} : vector<1x128xf32> to vector<1x64xf32>
    %128 = arith.mulf %125, %104 : vector<1x64xf32>
    %129 = arith.mulf %124, %126 : vector<1x64xf32>
    %130 = arith.addf %128, %129 : vector<1x64xf32>
    %131 = math.tanh %130 : vector<1x64xf32>
    %132 = arith.mulf %127, %131 : vector<1x64xf32>
    %133 = vector.extract_strided_slice %74 {offsets = [2, 0], sizes = [1, 256], strides = [1, 1]} : vector<8x256xf32> to vector<1x256xf32>
    %cst_35 = arith.constant dense<0.000000e+00> : vector<1x256xf32>
    %134 = tpu.matmul %132, %78, %cst_35 {dimension_numbers = #tpu.dot_dimension_numbers<[1], [0], [0], [1], [0, 0, 1, 1], [], []>} : vector<1x64xf32>, vector<64x256xf32>, vector<1x256xf32> -> vector<1x256xf32>
    %135 = arith.addf %133, %134 : vector<1x256xf32>
    %136 = vector.extract_strided_slice %135 {offsets = [0, 0], sizes = [1, 128], strides = [1, 1]} : vector<1x256xf32> to vector<1x128xf32>
    %137 = arith.negf %136 : vector<1x128xf32>
    %138 = math.exp %137 : vector<1x128xf32>
    %cst_36 = arith.constant 1.000000e+00 : f32
    %139 = vector.broadcast %cst_36 : f32 to vector<1x128xf32>
    %140 = arith.addf %139, %138 : vector<1x128xf32>
    %141 = arith.divf %139, %140 : vector<1x128xf32>
    %142 = vector.extract_strided_slice %135 {offsets = [0, 128], sizes = [1, 128], strides = [1, 1]} : vector<1x256xf32> to vector<1x128xf32>
    %143 = math.tanh %142 : vector<1x128xf32>
    %144 = arith.negf %142 : vector<1x128xf32>
    %145 = math.exp %144 : vector<1x128xf32>
    %cst_37 = arith.constant 1.000000e+00 : f32
    %146 = vector.broadcast %cst_37 : f32 to vector<1x128xf32>
    %147 = arith.addf %146, %145 : vector<1x128xf32>
    %148 = arith.divf %146, %147 : vector<1x128xf32>
    %149 = arith.select %77, %143, %148 : vector<1x128xi1>, vector<1x128xf32>
    %150 = vector.extract_strided_slice %141 {offsets = [0, 0], sizes = [1, 64], strides = [1, 1]} : vector<1x128xf32> to vector<1x64xf32>
    %151 = vector.extract_strided_slice %141 {offsets = [0, 64], sizes = [1, 64], strides = [1, 1]} : vector<1x128xf32> to vector<1x64xf32>
    %152 = vector.extract_strided_slice %149 {offsets = [0, 0], sizes = [1, 64], strides = [1, 1]} : vector<1x128xf32> to vector<1x64xf32>
    %153 = vector.extract_strided_slice %149 {offsets = [0, 64], sizes = [1, 64], strides = [1, 1]} : vector<1x128xf32> to vector<1x64xf32>
    %154 = arith.mulf %151, %130 : vector<1x64xf32>
    %155 = arith.mulf %150, %152 : vector<1x64xf32>
    %156 = arith.addf %154, %155 : vector<1x64xf32>
    %157 = math.tanh %156 : vector<1x64xf32>
    %158 = arith.mulf %153, %157 : vector<1x64xf32>
    %159 = vector.extract_strided_slice %74 {offsets = [3, 0], sizes = [1, 256], strides = [1, 1]} : vector<8x256xf32> to vector<1x256xf32>
    %cst_38 = arith.constant dense<0.000000e+00> : vector<1x256xf32>
    %160 = tpu.matmul %158, %78, %cst_38 {dimension_numbers = #tpu.dot_dimension_numbers<[1], [0], [0], [1], [0, 0, 1, 1], [], []>} : vector<1x64xf32>, vector<64x256xf32>, vector<1x256xf32> -> vector<1x256xf32>
    %161 = arith.addf %159, %160 : vector<1x256xf32>
    %162 = vector.extract_strided_slice %161 {offsets = [0, 0], sizes = [1, 128], strides = [1, 1]} : vector<1x256xf32> to vector<1x128xf32>
    %163 = arith.negf %162 : vector<1x128xf32>
    %164 = math.exp %163 : vector<1x128xf32>
    %cst_39 = arith.constant 1.000000e+00 : f32
    %165 = vector.broadcast %cst_39 : f32 to vector<1x128xf32>
    %166 = arith.addf %165, %164 : vector<1x128xf32>
    %167 = arith.divf %165, %166 : vector<1x128xf32>
    %168 = vector.extract_strided_slice %161 {offsets = [0, 128], sizes = [1, 128], strides = [1, 1]} : vector<1x256xf32> to vector<1x128xf32>
    %169 = math.tanh %168 : vector<1x128xf32>
    %170 = arith.negf %168 : vector<1x128xf32>
    %171 = math.exp %170 : vector<1x128xf32>
    %cst_40 = arith.constant 1.000000e+00 : f32
    %172 = vector.broadcast %cst_40 : f32 to vector<1x128xf32>
    %173 = arith.addf %172, %171 : vector<1x128xf32>
    %174 = arith.divf %172, %173 : vector<1x128xf32>
    %175 = arith.select %77, %169, %174 : vector<1x128xi1>, vector<1x128xf32>
    %176 = vector.extract_strided_slice %167 {offsets = [0, 0], sizes = [1, 64], strides = [1, 1]} : vector<1x128xf32> to vector<1x64xf32>
    %177 = vector.extract_strided_slice %167 {offsets = [0, 64], sizes = [1, 64], strides = [1, 1]} : vector<1x128xf32> to vector<1x64xf32>
    %178 = vector.extract_strided_slice %175 {offsets = [0, 0], sizes = [1, 64], strides = [1, 1]} : vector<1x128xf32> to vector<1x64xf32>
    %179 = vector.extract_strided_slice %175 {offsets = [0, 64], sizes = [1, 64], strides = [1, 1]} : vector<1x128xf32> to vector<1x64xf32>
    %180 = arith.mulf %177, %156 : vector<1x64xf32>
    %181 = arith.mulf %176, %178 : vector<1x64xf32>
    %182 = arith.addf %180, %181 : vector<1x64xf32>
    %183 = math.tanh %182 : vector<1x64xf32>
    %184 = arith.mulf %179, %183 : vector<1x64xf32>
    %185 = vector.extract_strided_slice %74 {offsets = [4, 0], sizes = [1, 256], strides = [1, 1]} : vector<8x256xf32> to vector<1x256xf32>
    %cst_41 = arith.constant dense<0.000000e+00> : vector<1x256xf32>
    %186 = tpu.matmul %184, %78, %cst_41 {dimension_numbers = #tpu.dot_dimension_numbers<[1], [0], [0], [1], [0, 0, 1, 1], [], []>} : vector<1x64xf32>, vector<64x256xf32>, vector<1x256xf32> -> vector<1x256xf32>
    %187 = arith.addf %185, %186 : vector<1x256xf32>
    %188 = vector.extract_strided_slice %187 {offsets = [0, 0], sizes = [1, 128], strides = [1, 1]} : vector<1x256xf32> to vector<1x128xf32>
    %189 = arith.negf %188 : vector<1x128xf32>
    %190 = math.exp %189 : vector<1x128xf32>
    %cst_42 = arith.constant 1.000000e+00 : f32
    %191 = vector.broadcast %cst_42 : f32 to vector<1x128xf32>
    %192 = arith.addf %191, %190 : vector<1x128xf32>
    %193 = arith.divf %191, %192 : vector<1x128xf32>
    %194 = vector.extract_strided_slice %187 {offsets = [0, 128], sizes = [1, 128], strides = [1, 1]} : vector<1x256xf32> to vector<1x128xf32>
    %195 = math.tanh %194 : vector<1x128xf32>
    %196 = arith.negf %194 : vector<1x128xf32>
    %197 = math.exp %196 : vector<1x128xf32>
    %cst_43 = arith.constant 1.000000e+00 : f32
    %198 = vector.broadcast %cst_43 : f32 to vector<1x128xf32>
    %199 = arith.addf %198, %197 : vector<1x128xf32>
    %200 = arith.divf %198, %199 : vector<1x128xf32>
    %201 = arith.select %77, %195, %200 : vector<1x128xi1>, vector<1x128xf32>
    %202 = vector.extract_strided_slice %193 {offsets = [0, 0], sizes = [1, 64], strides = [1, 1]} : vector<1x128xf32> to vector<1x64xf32>
    %203 = vector.extract_strided_slice %193 {offsets = [0, 64], sizes = [1, 64], strides = [1, 1]} : vector<1x128xf32> to vector<1x64xf32>
    %204 = vector.extract_strided_slice %201 {offsets = [0, 0], sizes = [1, 64], strides = [1, 1]} : vector<1x128xf32> to vector<1x64xf32>
    %205 = vector.extract_strided_slice %201 {offsets = [0, 64], sizes = [1, 64], strides = [1, 1]} : vector<1x128xf32> to vector<1x64xf32>
    %206 = arith.mulf %203, %182 : vector<1x64xf32>
    %207 = arith.mulf %202, %204 : vector<1x64xf32>
    %208 = arith.addf %206, %207 : vector<1x64xf32>
    %209 = math.tanh %208 : vector<1x64xf32>
    %210 = arith.mulf %205, %209 : vector<1x64xf32>
    %211 = vector.extract_strided_slice %74 {offsets = [5, 0], sizes = [1, 256], strides = [1, 1]} : vector<8x256xf32> to vector<1x256xf32>
    %cst_44 = arith.constant dense<0.000000e+00> : vector<1x256xf32>
    %212 = tpu.matmul %210, %78, %cst_44 {dimension_numbers = #tpu.dot_dimension_numbers<[1], [0], [0], [1], [0, 0, 1, 1], [], []>} : vector<1x64xf32>, vector<64x256xf32>, vector<1x256xf32> -> vector<1x256xf32>
    %213 = arith.addf %211, %212 : vector<1x256xf32>
    %214 = vector.extract_strided_slice %213 {offsets = [0, 0], sizes = [1, 128], strides = [1, 1]} : vector<1x256xf32> to vector<1x128xf32>
    %215 = arith.negf %214 : vector<1x128xf32>
    %216 = math.exp %215 : vector<1x128xf32>
    %cst_45 = arith.constant 1.000000e+00 : f32
    %217 = vector.broadcast %cst_45 : f32 to vector<1x128xf32>
    %218 = arith.addf %217, %216 : vector<1x128xf32>
    %219 = arith.divf %217, %218 : vector<1x128xf32>
    %220 = vector.extract_strided_slice %213 {offsets = [0, 128], sizes = [1, 128], strides = [1, 1]} : vector<1x256xf32> to vector<1x128xf32>
    %221 = math.tanh %220 : vector<1x128xf32>
    %222 = arith.negf %220 : vector<1x128xf32>
    %223 = math.exp %222 : vector<1x128xf32>
    %cst_46 = arith.constant 1.000000e+00 : f32
    %224 = vector.broadcast %cst_46 : f32 to vector<1x128xf32>
    %225 = arith.addf %224, %223 : vector<1x128xf32>
    %226 = arith.divf %224, %225 : vector<1x128xf32>
    %227 = arith.select %77, %221, %226 : vector<1x128xi1>, vector<1x128xf32>
    %228 = vector.extract_strided_slice %219 {offsets = [0, 0], sizes = [1, 64], strides = [1, 1]} : vector<1x128xf32> to vector<1x64xf32>
    %229 = vector.extract_strided_slice %219 {offsets = [0, 64], sizes = [1, 64], strides = [1, 1]} : vector<1x128xf32> to vector<1x64xf32>
    %230 = vector.extract_strided_slice %227 {offsets = [0, 0], sizes = [1, 64], strides = [1, 1]} : vector<1x128xf32> to vector<1x64xf32>
    %231 = vector.extract_strided_slice %227 {offsets = [0, 64], sizes = [1, 64], strides = [1, 1]} : vector<1x128xf32> to vector<1x64xf32>
    %232 = arith.mulf %229, %208 : vector<1x64xf32>
    %233 = arith.mulf %228, %230 : vector<1x64xf32>
    %234 = arith.addf %232, %233 : vector<1x64xf32>
    %235 = math.tanh %234 : vector<1x64xf32>
    %236 = arith.mulf %231, %235 : vector<1x64xf32>
    %237 = vector.extract_strided_slice %74 {offsets = [6, 0], sizes = [1, 256], strides = [1, 1]} : vector<8x256xf32> to vector<1x256xf32>
    %cst_47 = arith.constant dense<0.000000e+00> : vector<1x256xf32>
    %238 = tpu.matmul %236, %78, %cst_47 {dimension_numbers = #tpu.dot_dimension_numbers<[1], [0], [0], [1], [0, 0, 1, 1], [], []>} : vector<1x64xf32>, vector<64x256xf32>, vector<1x256xf32> -> vector<1x256xf32>
    %239 = arith.addf %237, %238 : vector<1x256xf32>
    %240 = vector.extract_strided_slice %239 {offsets = [0, 0], sizes = [1, 128], strides = [1, 1]} : vector<1x256xf32> to vector<1x128xf32>
    %241 = arith.negf %240 : vector<1x128xf32>
    %242 = math.exp %241 : vector<1x128xf32>
    %cst_48 = arith.constant 1.000000e+00 : f32
    %243 = vector.broadcast %cst_48 : f32 to vector<1x128xf32>
    %244 = arith.addf %243, %242 : vector<1x128xf32>
    %245 = arith.divf %243, %244 : vector<1x128xf32>
    %246 = vector.extract_strided_slice %239 {offsets = [0, 128], sizes = [1, 128], strides = [1, 1]} : vector<1x256xf32> to vector<1x128xf32>
    %247 = math.tanh %246 : vector<1x128xf32>
    %248 = arith.negf %246 : vector<1x128xf32>
    %249 = math.exp %248 : vector<1x128xf32>
    %cst_49 = arith.constant 1.000000e+00 : f32
    %250 = vector.broadcast %cst_49 : f32 to vector<1x128xf32>
    %251 = arith.addf %250, %249 : vector<1x128xf32>
    %252 = arith.divf %250, %251 : vector<1x128xf32>
    %253 = arith.select %77, %247, %252 : vector<1x128xi1>, vector<1x128xf32>
    %254 = vector.extract_strided_slice %245 {offsets = [0, 0], sizes = [1, 64], strides = [1, 1]} : vector<1x128xf32> to vector<1x64xf32>
    %255 = vector.extract_strided_slice %245 {offsets = [0, 64], sizes = [1, 64], strides = [1, 1]} : vector<1x128xf32> to vector<1x64xf32>
    %256 = vector.extract_strided_slice %253 {offsets = [0, 0], sizes = [1, 64], strides = [1, 1]} : vector<1x128xf32> to vector<1x64xf32>
    %257 = vector.extract_strided_slice %253 {offsets = [0, 64], sizes = [1, 64], strides = [1, 1]} : vector<1x128xf32> to vector<1x64xf32>
    %258 = arith.mulf %255, %234 : vector<1x64xf32>
    %259 = arith.mulf %254, %256 : vector<1x64xf32>
    %260 = arith.addf %258, %259 : vector<1x64xf32>
    %261 = math.tanh %260 : vector<1x64xf32>
    %262 = arith.mulf %257, %261 : vector<1x64xf32>
    %263 = vector.extract_strided_slice %74 {offsets = [7, 0], sizes = [1, 256], strides = [1, 1]} : vector<8x256xf32> to vector<1x256xf32>
    %cst_50 = arith.constant dense<0.000000e+00> : vector<1x256xf32>
    %264 = tpu.matmul %262, %78, %cst_50 {dimension_numbers = #tpu.dot_dimension_numbers<[1], [0], [0], [1], [0, 0, 1, 1], [], []>} : vector<1x64xf32>, vector<64x256xf32>, vector<1x256xf32> -> vector<1x256xf32>
    %265 = arith.addf %263, %264 : vector<1x256xf32>
    %266 = vector.extract_strided_slice %265 {offsets = [0, 0], sizes = [1, 128], strides = [1, 1]} : vector<1x256xf32> to vector<1x128xf32>
    %267 = arith.negf %266 : vector<1x128xf32>
    %268 = math.exp %267 : vector<1x128xf32>
    %cst_51 = arith.constant 1.000000e+00 : f32
    %269 = vector.broadcast %cst_51 : f32 to vector<1x128xf32>
    %270 = arith.addf %269, %268 : vector<1x128xf32>
    %271 = arith.divf %269, %270 : vector<1x128xf32>
    %272 = vector.extract_strided_slice %265 {offsets = [0, 128], sizes = [1, 128], strides = [1, 1]} : vector<1x256xf32> to vector<1x128xf32>
    %273 = math.tanh %272 : vector<1x128xf32>
    %274 = arith.negf %272 : vector<1x128xf32>
    %275 = math.exp %274 : vector<1x128xf32>
    %cst_52 = arith.constant 1.000000e+00 : f32
    %276 = vector.broadcast %cst_52 : f32 to vector<1x128xf32>
    %277 = arith.addf %276, %275 : vector<1x128xf32>
    %278 = arith.divf %276, %277 : vector<1x128xf32>
    %279 = arith.select %77, %273, %278 : vector<1x128xi1>, vector<1x128xf32>
    %280 = vector.extract_strided_slice %271 {offsets = [0, 0], sizes = [1, 64], strides = [1, 1]} : vector<1x128xf32> to vector<1x64xf32>
    %281 = vector.extract_strided_slice %271 {offsets = [0, 64], sizes = [1, 64], strides = [1, 1]} : vector<1x128xf32> to vector<1x64xf32>
    %282 = vector.extract_strided_slice %279 {offsets = [0, 0], sizes = [1, 64], strides = [1, 1]} : vector<1x128xf32> to vector<1x64xf32>
    %283 = vector.extract_strided_slice %279 {offsets = [0, 64], sizes = [1, 64], strides = [1, 1]} : vector<1x128xf32> to vector<1x64xf32>
    %284 = arith.mulf %281, %260 : vector<1x64xf32>
    %285 = arith.mulf %280, %282 : vector<1x64xf32>
    %286 = arith.addf %284, %285 : vector<1x64xf32>
    %287 = math.tanh %286 : vector<1x64xf32>
    %288 = arith.mulf %283, %287 : vector<1x64xf32>
    %c0_53 = arith.constant 0 : index
    %c0_54 = arith.constant 0 : index
    %289 = vector.load %arg8[%c0_53, %c0_54] : memref<64x256xf32, #tpu.memory_space<vmem>>, vector<64x256xf32>
    %cst_55 = arith.constant dense<0.000000e+00> : vector<1x256xf32>
    %290 = tpu.matmul %288, %289, %cst_55 {dimension_numbers = #tpu.dot_dimension_numbers<[1], [0], [0], [1], [0, 0, 1, 1], [], []>} : vector<1x64xf32>, vector<64x256xf32>, vector<1x256xf32> -> vector<1x256xf32>
    %c0_56 = arith.constant 0 : index
    %c0_57 = arith.constant 0 : index
    %291 = vector.load %arg9[%c0_56, %c0_57] : memref<1x256xf32, #tpu.memory_space<vmem>>, vector<1x256xf32>
    %292 = arith.addf %290, %291 : vector<1x256xf32>
    %c0_58 = arith.constant 0 : index
    %c0_59 = arith.constant 0 : index
    %c0_60 = arith.constant 0 : index
    %293 = vector.load %arg10[%c0_58, %c0_59, %c0_60] : memref<1x1x256xf32, #tpu.memory_space<vmem>>, vector<1x1x256xf32>
    %294 = vector.shape_cast %293 : vector<1x1x256xf32> to vector<1x256xf32>
    %295 = vector.shape_cast %292 : vector<1x256xf32> to vector<1x1x256xf32>
    tpu.vector_store %arg10[%c0_58, %c0_59, %c0_60], %295 {strides = array<i32>} : memref<1x1x256xf32, #tpu.memory_space<vmem>>, vector<1x1x256xf32>,
    return
  }
  func.func @transform_0(%arg0: i32) -> (i32, i32, i32) {
    %c0_i32 = arith.constant 0 : i32
    %c0_i32_0 = arith.constant 0 : i32
    %c0_i32_1 = arith.constant 0 : i32
    return %arg0, %c0_i32, %c0_i32_0 : i32, i32, i32
  }
  func.func @transform_1(%arg0: i32) -> (i32, i32) {
    %c0_i32 = arith.constant 0 : i32
    %c0_i32_0 = arith.constant 0 : i32
    %c0_i32_1 = arith.constant 0 : i32
    return %c0_i32, %c0_i32_0 : i32, i32
  }
  func.func @transform_2(%arg0: i32) -> (i32, i32) {
    %c0_i32 = arith.constant 0 : i32
    %c0_i32_0 = arith.constant 0 : i32
    %c0_i32_1 = arith.constant 0 : i32
    return %c0_i32, %c0_i32_0 : i32, i32
  }
  func.func @transform_3(%arg0: i32) -> (i32, i32) {
    %c0_i32 = arith.constant 0 : i32
    %c0_i32_0 = arith.constant 0 : i32
    %c0_i32_1 = arith.constant 0 : i32
    return %c0_i32, %c0_i32_0 : i32, i32
  }
  func.func @transform_4(%arg0: i32) -> (i32, i32) {
    %c0_i32 = arith.constant 0 : i32
    %c0_i32_0 = arith.constant 0 : i32
    %c0_i32_1 = arith.constant 0 : i32
    return %c0_i32, %c0_i32_0 : i32, i32
  }
  func.func @transform_5(%arg0: i32) -> (i32, i32) {
    %c0_i32 = arith.constant 0 : i32
    %c0_i32_0 = arith.constant 0 : i32
    %c0_i32_1 = arith.constant 0 : i32
    return %c0_i32, %c0_i32_0 : i32, i32
  }
  func.func @transform_6(%arg0: i32) -> (i32, i32) {
    %c0_i32 = arith.constant 0 : i32
    %c0_i32_0 = arith.constant 0 : i32
    %c0_i32_1 = arith.constant 0 : i32
    return %c0_i32, %c0_i32_0 : i32, i32
  }
  func.func @transform_7(%arg0: i32) -> (i32, i32) {
    %c0_i32 = arith.constant 0 : i32
    %c0_i32_0 = arith.constant 0 : i32
    %c0_i32_1 = arith.constant 0 : i32
    return %c0_i32, %c0_i32_0 : i32, i32
  }
  func.func @transform_8(%arg0: i32) -> (i32, i32) {
    %c0_i32 = arith.constant 0 : i32
    %c0_i32_0 = arith.constant 0 : i32
    %c0_i32_1 = arith.constant 0 : i32
    return %c0_i32, %c0_i32_0 : i32, i32
  }
  func.func @transform_9(%arg0: i32) -> (i32, i32, i32) {
    %c0_i32 = arith.constant 0 : i32
    %c0_i32_0 = arith.constant 0 : i32
    %c0_i32_1 = arith.constant 0 : i32
    return %arg0, %c0_i32, %c0_i32_0 : i32, i32, i32
  }
}

</mosaic_0001>

<llo_original>
// kernel: configure_model_forward.1
$region0: #{configure_model_forward.1}
  #allocation0 [shape = 'u32[]', space=smem, size = 0x4, offset = 0x4, fixed_abs, tag = 'smem constant byte address 0x4 - core index']
  #allocation1 [shape = 'u32[72,128]{1,0:T(1,128)}', space=vmem, size = 0x9000, scoped, tag = 'internal scratch']
  %s0 = inlined_call_operand.vmem [shape: s32[4,8,2], index: 0, kind: input, shape index: {}]
  %s1 = inlined_call_operand.vmem [shape: f32[32,32], index: 1, kind: input, shape index: {}]
  %s2 = inlined_call_operand.vmem [shape: f32[1,32], index: 2, kind: input, shape index: {}]
  %s3 = inlined_call_operand.vmem [shape: f32[1,32], index: 3, kind: input, shape index: {}]
  %s4 = inlined_call_operand.hbm [shape: f32[32,256], index: 4, kind: input, shape index: {}]
  %s5 = inlined_call_operand.hbm [shape: f32[64,256], index: 5, kind: input, shape index: {}]
  %s6 = inlined_call_operand.vmem [shape: f32[1,256], index: 6, kind: input, shape index: {}]
  %s7 = inlined_call_operand.hbm [shape: f32[64,256], index: 7, kind: input, shape index: {}]
  %s8 = inlined_call_operand.vmem [shape: f32[1,256], index: 8, kind: input, shape index: {}]
  %s9 = inlined_call_operand.vmem [shape: f32[4,1,256], index: 9, kind: output, shape index: {}]
  %s10 = sld [smem:[#allocation0]]
  $region81: #{configure_model_forward.1} parent=0
    _
  %s12 = ssub.s32 1, %s10
  %s13 = scalar_select 0, %s12, %s10
  $region1: #{configure_model_forward.1} parent=0
    #allocation2 [shape = 'u8[32768]{0}', space=vmem, size = 0x8000, scoped, tag = 'input window, operand 4, single buffered']
    #allocation3 [shape = 's32[2]{0}', space=sflag, size = 0x8, scoped, tag = 'scoped memory for configure_model_forward.1']
    #allocation4 [shape = 'u8[65536]{0}', space=vmem, size = 0x10000, scoped, tag = 'input window, operand 5, single buffered']
    #allocation5 [shape = 's32[1]{0}', space=sflag, size = 0x4, scoped, tag = 'scoped memory for configure_model_forward.1']
    #allocation6 [shape = 'u8[65536]{0}', space=vmem, size = 0x10000, scoped, tag = 'input window, operand 7, single buffered']
    %14 = vsyncpa [#allocation3], 0
    %15 = vsyncpa [#allocation5], 0
    loop: start=0, step=1, limit=6
    $region2: #{configure_model_forward.1} parent=1 // loop_pre_header
      _
    $region3: #{configure_model_forward.1} parent=1 // loop_header
      %s17 = sphi 0, %s21
      %p18 = scmp.ge.s32.totalorder %s17, 6
      %s27 = sphi 0, %s29
      %s30 = sphi 0, %s27
      %s31 = sphi 0, %s30
      %s47 = sphi 0, %s31
      %s51 = sphi 0, %s51
      %s53 = sphi 0, %s51
      %s54 = sphi 0, %s53
      %s68 = sphi 0, %s54
      %s72 = sphi 0, %s72
      %s74 = sphi 0, %s72
      %s75 = sphi 0, %s74
      %s89 = sphi 0, %s75
      %s93 = sphi 0, %s93
      %s95 = sphi 0, %s93
      %s96 = sphi 0, %s95
      %s110 = sphi 0, %s96
      %s114 = sphi 0, %s114
      %s116 = sphi 0, %s114
      %s117 = sphi 0, %s116
      %s131 = sphi 0, %s117
      %s135 = sphi 0, %s135
      %s137 = sphi 0, %s135
      %s138 = sphi 0, %s137
      %s152 = sphi 0, %s138
      %s156 = sphi 0, %s156
      %s158 = sphi 0, %s156
      %s159 = sphi 0, %s158
      %s173 = sphi 0, %s159
      %s177 = sphi 0, %s177
      %s179 = sphi 0, %s177
      %s180 = sphi 0, %s179
      %s194 = sphi 0, %s180
      %s198 = sphi 0, %s198
      %s200 = sphi 0, %s198
      %s201 = sphi 0, %s200
      %s215 = sphi 0, %s201
      %s221 = sphi 0, %s223
      %s224 = sphi 0, %s221
      %s225 = sphi 0, %s224
      %s241 = sphi 0, %s225
    $region4: #{configure_model_forward.1} parent=1 // loop_header_branch
      %20 = sbr.rel (%p18) target = $region8
    $region5: #{configure_model_forward.1} parent=1 // loop_body
      %s22 = ssub.s32 %s17, 1
      %s23 = ssub.s32 %s17, 2
      %s24 = sadd.s32 %s17, 1
      %s25 = ssub.s32 %s17, %s24
      %p26 = scmp.eq.s32.totalorder %s25, 0
      %s28 = sadd.s32 %s27, 1
      %s29 = scalar_select %p26, %s27, %s28
      %p32 = pneg %p26
      %p33 = scmp.eq.s32.totalorder %s17, 3
      %p34 = por %p32, %p33
      %p35 = scmp.ne.s32.totalorder %s27, %s30
      %p36 = scmp.eq.s32.totalorder %s17, 0
      %p37 = por %p35, %p36
      %p38 = scmp.ne.s32.totalorder %s27, %s30
      %p39 = scmp.eq.s32.totalorder %s22, 3
      %p40 = por %p38, %p39
      %p41 = scmp.ne.s32.totalorder %s30, %s31
      %p42 = scmp.eq.s32.totalorder %s22, 0
      %p43 = por %p41, %p42
      %p44 = scmp.ne.s32.totalorder %s30, %s31
      %p45 = scmp.eq.s32.totalorder %s23, 3
      %p46 = por %p44, %p45
      %p48 = scmp.ne.s32.totalorder %s31, %s47
      %p49 = scmp.eq.s32.totalorder %s23, 0
      %p50 = por %p48, %p49
      %s52 = sadd.s32 %s51, 1
      %p55 = scmp.eq.s32.totalorder %s17, 3
      %p56 = scmp.ne.s32.totalorder %s51, %s53
      %p57 = scmp.eq.s32.totalorder %s17, 0
      %p58 = por %p56, %p57
      %p59 = scmp.ne.s32.totalorder %s51, %s53
      %p60 = scmp.eq.s32.totalorder %s22, 3
      %p61 = por %p59, %p60
      %p62 = scmp.ne.s32.totalorder %s53, %s54
      %p63 = scmp.eq.s32.totalorder %s22, 0
      %p64 = por %p62, %p63
      %p65 = scmp.ne.s32.totalorder %s53, %s54
      %p66 = scmp.eq.s32.totalorder %s23, 3
      %p67 = por %p65, %p66
      %p69 = scmp.ne.s32.totalorder %s54, %s68
      %p70 = scmp.eq.s32.totalorder %s23, 0
      %p71 = por %p69, %p70
      %s73 = sadd.s32 %s72, 1
      %p76 = scmp.eq.s32.totalorder %s17, 3
      %p77 = scmp.ne.s32.totalorder %s72, %s74
      %p78 = scmp.eq.s32.totalorder %s17, 0
      %p79 = por %p77, %p78
      %p80 = scmp.ne.s32.totalorder %s72, %s74
      %p81 = scmp.eq.s32.totalorder %s22, 3
      %p82 = por %p80, %p81
      %p83 = scmp.ne.s32.totalorder %s74, %s75
      %p84 = scmp.eq.s32.totalorder %s22, 0
      %p85 = por %p83, %p84
      %p86 = scmp.ne.s32.totalorder %s74, %s75
      %p87 = scmp.eq.s32.totalorder %s23, 3
      %p88 = por %p86, %p87
      %p90 = scmp.ne.s32.totalorder %s75, %s89
      %p91 = scmp.eq.s32.totalorder %s23, 0
      %p92 = por %p90, %p91
      %s94 = sadd.s32 %s93, 1
      %p97 = scmp.eq.s32.totalorder %s17, 3
      %p98 = scmp.ne.s32.totalorder %s93, %s95
      %p99 = scmp.eq.s32.totalorder %s17, 0
      %p100 = por %p98, %p99
      %p101 = scmp.ne.s32.totalorder %s93, %s95
      %p102 = scmp.eq.s32.totalorder %s22, 3
      %p103 = por %p101, %p102
      %p104 = scmp.ne.s32.totalorder %s95, %s96
      %p105 = scmp.eq.s32.totalorder %s22, 0
      %p106 = por %p104, %p105
      %p107 = scmp.ne.s32.totalorder %s95, %s96
      %p108 = scmp.eq.s32.totalorder %s23, 3
      %p109 = por %p107, %p108
      %p111 = scmp.ne.s32.totalorder %s96, %s110
      %p112 = scmp.eq.s32.totalorder %s23, 0
      %p113 = por %p111, %p112
      %s115 = sadd.s32 %s114, 1
      %p118 = scmp.eq.s32.totalorder %s17, 3
      %p119 = scmp.ne.s32.totalorder %s114, %s116
      %p120 = scmp.eq.s32.totalorder %s17, 0
      %p121 = por %p119, %p120
      %p122 = scmp.ne.s32.totalorder %s114, %s116
      %p123 = scmp.eq.s32.totalorder %s22, 3
      %p124 = por %p122, %p123
      %p125 = scmp.ne.s32.totalorder %s116, %s117
      %p126 = scmp.eq.s32.totalorder %s22, 0
      %p127 = por %p125, %p126
      %p128 = scmp.ne.s32.totalorder %s116, %s117
      %p129 = scmp.eq.s32.totalorder %s23, 3
      %p130 = por %p128, %p129
      %p132 = scmp.ne.s32.totalorder %s117, %s131
      %p133 = scmp.eq.s32.totalorder %s23, 0
      %p134 = por %p132, %p133
      %s136 = sadd.s32 %s135, 1
      %p139 = scmp.eq.s32.totalorder %s17, 3
      %p140 = scmp.ne.s32.totalorder %s135, %s137
      %p141 = scmp.eq.s32.totalorder %s17, 0
      %p142 = por %p140, %p141
      %p143 = scmp.ne.s32.totalorder %s135, %s137
      %p144 = scmp.eq.s32.totalorder %s22, 3
      %p145 = por %p143, %p144
      %p146 = scmp.ne.s32.totalorder %s137, %s138
      %p147 = scmp.eq.s32.totalorder %s22, 0
      %p148 = por %p146, %p147
      %p149 = scmp.ne.s32.totalorder %s137, %s138
      %p150 = scmp.eq.s32.totalorder %s23, 3
      %p151 = por %p149, %p150
      %p153 = scmp.ne.s32.totalorder %s138, %s152
      %p154 = scmp.eq.s32.totalorder %s23, 0
      %p155 = por %p153, %p154
      %s157 = sadd.s32 %s156, 1
      %p160 = scmp.eq.s32.totalorder %s17, 3
      %p161 = scmp.ne.s32.totalorder %s156, %s158
      %p162 = scmp.eq.s32.totalorder %s17, 0
      %p163 = por %p161, %p162
      %p164 = scmp.ne.s32.totalorder %s156, %s158
      %p165 = scmp.eq.s32.totalorder %s22, 3
      %p166 = por %p164, %p165
      %p167 = scmp.ne.s32.totalorder %s158, %s159
      %p168 = scmp.eq.s32.totalorder %s22, 0
      %p169 = por %p167, %p168
      %p170 = scmp.ne.s32.totalorder %s158, %s159
      %p171 = scmp.eq.s32.totalorder %s23, 3
      %p172 = por %p170, %p171
      %p174 = scmp.ne.s32.totalorder %s159, %s173
      %p175 = scmp.eq.s32.totalorder %s23, 0
      %p176 = por %p174, %p175
      %s178 = sadd.s32 %s177, 1
      %p181 = scmp.eq.s32.totalorder %s17, 3
      %p182 = scmp.ne.s32.totalorder %s177, %s179
      %p183 = scmp.eq.s32.totalorder %s17, 0
      %p184 = por %p182, %p183
      %p185 = scmp.ne.s32.totalorder %s177, %s179
      %p186 = scmp.eq.s32.totalorder %s22, 3
      %p187 = por %p185, %p186
      %p188 = scmp.ne.s32.totalorder %s179, %s180
      %p189 = scmp.eq.s32.totalorder %s22, 0
      %p190 = por %p188, %p189
      %p191 = scmp.ne.s32.totalorder %s179, %s180
      %p192 = scmp.eq.s32.totalorder %s23, 3
      %p193 = por %p191, %p192
      %p195 = scmp.ne.s32.totalorder %s180, %s194
      %p196 = scmp.eq.s32.totalorder %s23, 0
      %p197 = por %p195, %p196
      %s199 = sadd.s32 %s198, 1
      %p202 = scmp.eq.s32.totalorder %s17, 3
      %p203 = scmp.ne.s32.totalorder %s198, %s200
      %p204 = scmp.eq.s32.totalorder %s17, 0
      %p205 = por %p203, %p204
      %p206 = scmp.ne.s32.totalorder %s198, %s200
      %p207 = scmp.eq.s32.totalorder %s22, 3
      %p208 = por %p206, %p207
      %p209 = scmp.ne.s32.totalorder %s200, %s201
      %p210 = scmp.eq.s32.totalorder %s22, 0
      %p211 = por %p209, %p210
      %p212 = scmp.ne.s32.totalorder %s200, %s201
      %p213 = scmp.eq.s32.totalorder %s23, 3
      %p214 = por %p212, %p213
      %p216 = scmp.ne.s32.totalorder %s201, %s215
      %p217 = scmp.eq.s32.totalorder %s23, 0
      %p218 = por %p216, %p217
      %s219 = ssub.s32 %s17, %s24
      %p220 = scmp.eq.s32.totalorder %s219, 0
      %s222 = sadd.s32 %s221, 1
      %s223 = scalar_select %p220, %s221, %s222
      %p226 = pneg %p220
      %p227 = scmp.eq.s32.totalorder %s17, 3
      %p228 = por %p226, %p227
      %p229 = scmp.ne.s32.totalorder %s221, %s224
      %p230 = scmp.eq.s32.totalorder %s17, 0
      %p231 = por %p229, %p230
      %p232 = scmp.ne.s32.totalorder %s221, %s224
      %p233 = scmp.eq.s32.totalorder %s22, 3
      %p234 = por %p232, %p233
      %p235 = scmp.ne.s32.totalorder %s224, %s225
      %p236 = scmp.eq.s32.totalorder %s22, 0
      %p237 = por %p235, %p236
      %p238 = scmp.ne.s32.totalorder %s224, %s225
      %p239 = scmp.eq.s32.totalorder %s23, 3
      %p240 = por %p238, %p239
      %p242 = scmp.ne.s32.totalorder %s225, %s241
      %p243 = scmp.eq.s32.totalorder %s23, 0
      %p244 = por %p242, %p243
      %p245 = scmp.le.s32.totalorder 1, %s17
      %p246 = scmp.lt.s32.totalorder %s17, 5
      %p247 = pnand %p245, %p246
      %p248 = pneg %p247
      // Predicated region
      $region9: #{configure_model_forward.1} parent=5 // pred_check
        _
      $region10: #{configure_model_forward.1} parent=5 // pred_check_branch
        %250 = sbr.rel (%p247) target = $region12
      $region11: #{configure_model_forward.1} parent=5 // pred_region
        %s251 = ssub.s32 %s17, 1
        // Predicated region
        $region13: #{configure_model_forward.1} parent=11 // pred_check
          %p252 = pneg %p64
        $region14: #{configure_model_forward.1} parent=11 // pred_check_branch
          %254 = sbr.rel (%p252) target = $region16
        $region15: #{configure_model_forward.1} parent=11 // pred_region
          _
        $region16: #{configure_model_forward.1} parent=11 // pred_fallthru
          _
        // Predicated region
        $region17: #{configure_model_forward.1} parent=11 // pred_check
          %p255 = pneg %p85
        $region18: #{configure_model_forward.1} parent=11 // pred_check_branch
          %257 = sbr.rel (%p255) target = $region20
        $region19: #{configure_model_forward.1} parent=11 // pred_region
          _
        $region20: #{configure_model_forward.1} parent=11 // pred_fallthru
          _
        // Predicated region
        $region21: #{configure_model_forward.1} parent=11 // pred_check
          %p258 = pneg %p106
        $region22: #{configure_model_forward.1} parent=11 // pred_check_branch
          %260 = sbr.rel (%p258) target = $region24
        $region23: #{configure_model_forward.1} parent=11 // pred_region
          _
        $region24: #{configure_model_forward.1} parent=11 // pred_fallthru
          _
        // Predicated region
        $region25: #{configure_model_forward.1} parent=11 // pred_check
          %p261 = pneg %p127
        $region26: #{configure_model_forward.1} parent=11 // pred_check_branch
          %263 = sbr.rel (%p261) target = $region28
        $region27: #{configure_model_forward.1} parent=11 // pred_region
          %265 = vsyncadd [#allocation3], 0
          %s266 = sshll.u32 %s4, 4
          %s267 = int_to_ptr.hbm [resolvable:$true] %s266
          %s268 = sshll.u32 [#allocation2], 4
          %s269 = int_to_ptr.vmem [resolvable:$true] %s268
          %274 = dma.hbm_to_vmem [thread:$0]  %s267, 1024, %s269, [#allocation3], 256, 256, 16
        $region28: #{configure_model_forward.1} parent=11 // pred_fallthru
          _
        // Predicated region
        $region29: #{configure_model_forward.1} parent=11 // pred_check
          %p275 = pneg %p148
        $region30: #{configure_model_forward.1} parent=11 // pred_check_branch
          %277 = sbr.rel (%p275) target = $region32
        $region31: #{configure_model_forward.1} parent=11 // pred_region
          %279 = vsyncadd [#allocation5], 0
          %s280 = sshll.u32 %s5, 4
          %s281 = int_to_ptr.hbm [resolvable:$true] %s280
          %s282 = sshll.u32 [#allocation4], 4
          %s283 = int_to_ptr.vmem [resolvable:$true] %s282
          %288 = dma.hbm_to_vmem [thread:$0]  %s281, 2048, %s283, [#allocation5], 256, 256, 16
        $region32: #{configure_model_forward.1} parent=11 // pred_fallthru
          _
        // Predicated region
        $region33: #{configure_model_forward.1} parent=11 // pred_check
          %p289 = pneg %p169
        $region34: #{configure_model_forward.1} parent=11 // pred_check_branch
          %291 = sbr.rel (%p289) target = $region36
        $region35: #{configure_model_forward.1} parent=11 // pred_region
          _
        $region36: #{configure_model_forward.1} parent=11 // pred_fallthru
          _
        // Predicated region
        $region37: #{configure_model_forward.1} parent=11 // pred_check
          %p292 = pneg %p190
        $region38: #{configure_model_forward.1} parent=11 // pred_check_branch
          %294 = sbr.rel (%p292) target = $region40
        $region39: #{configure_model_forward.1} parent=11 // pred_region
          %296 = vsyncadd [#allocation5], 0
          %s297 = sshll.u32 %s7, 4
          %s298 = int_to_ptr.hbm [resolvable:$true] %s297
          %s299 = sshll.u32 [#allocation6], 4
          %s300 = int_to_ptr.vmem [resolvable:$true] %s299
          %305 = dma.hbm_to_vmem [thread:$0]  %s298, 2048, %s300, [#allocation5], 256, 256, 16
        $region40: #{configure_model_forward.1} parent=11 // pred_fallthru
          _
        // Predicated region
        $region41: #{configure_model_forward.1} parent=11 // pred_check
          %p306 = pneg %p211
        $region42: #{configure_model_forward.1} parent=11 // pred_check_branch
          %308 = sbr.rel (%p306) target = $region44
        $region43: #{configure_model_forward.1} parent=11 // pred_region
          _
        $region44: #{configure_model_forward.1} parent=11 // pred_fallthru
          _
      $region12: #{configure_model_forward.1} parent=5 // pred_fallthru
        _
      %p309 = scmp.lt.s32.totalorder %s17, 4
      // Predicated region
      $region45: #{configure_model_forward.1} parent=5 // pred_check
        %p310 = pneg %p309
      $region46: #{configure_model_forward.1} parent=5 // pred_check_branch
        %312 = sbr.rel (%p310) target = $region48
      $region47: #{configure_model_forward.1} parent=5 // pred_region
        // Predicated region
        $region49: #{configure_model_forward.1} parent=47 // pred_check
          %p313 = pneg %p37
        $region50: #{configure_model_forward.1} parent=47 // pred_check_branch
          %315 = sbr.rel (%p313) target = $region52
        $region51: #{configure_model_forward.1} parent=47 // pred_region
          %p316 = scmp.lt.s32.totalorder %s17, 3
          %s317 = scalar_select %p316, %s17, 3
          %s318 = smul.addr %s317, 8
          %s319 = scalar_lea.vmem %s0, %s318
        $region52: #{configure_model_forward.1} parent=47 // pred_fallthru
          _
      $region48: #{configure_model_forward.1} parent=5 // pred_fallthru
        _
      %p320 = scmp.le.s32.totalorder 1, %s17
      %p321 = scmp.lt.s32.totalorder %s17, 5
      %p322 = pnand %p320, %p321
      %p323 = pneg %p322
      // Predicated region
      $region53: #{configure_model_forward.1} parent=5 // pred_check
        _
      $region54: #{configure_model_forward.1} parent=5 // pred_check_branch
        %325 = sbr.rel (%p322) target = $region56
      $region55: #{configure_model_forward.1} parent=5 // pred_region
        %s326 = ssub.s32 %s17, 1
        // Predicated region
        $region57: #{configure_model_forward.1} parent=55 // pred_check
          %p327 = pneg %p127
        $region58: #{configure_model_forward.1} parent=55 // pred_check_branch
          %329 = sbr.rel (%p327) target = $region60
        $region59: #{configure_model_forward.1} parent=55 // pred_region
          %331 = dma.done [#allocation3], 1024
        $region60: #{configure_model_forward.1} parent=55 // pred_fallthru
          _
        // Predicated region
        $region61: #{configure_model_forward.1} parent=55 // pred_check
          %p332 = pneg %p148
        $region62: #{configure_model_forward.1} parent=55 // pred_check_branch
          %334 = sbr.rel (%p332) target = $region64
        $region63: #{configure_model_forward.1} parent=55 // pred_region
          %336 = dma.done [#allocation5], 2048
        $region64: #{configure_model_forward.1} parent=55 // pred_fallthru
          _
        // Predicated region
        $region65: #{configure_model_forward.1} parent=55 // pred_check
          %p337 = pneg %p190
        $region66: #{configure_model_forward.1} parent=55 // pred_check_branch
          %339 = sbr.rel (%p337) target = $region68
        $region67: #{configure_model_forward.1} parent=55 // pred_region
          %341 = dma.done [#allocation5], 2048
        $region68: #{configure_model_forward.1} parent=55 // pred_fallthru
          _
        %p342 = scmp.lt.s32.totalorder %s22, 3
        %s343 = scalar_select %p342, %s22, 3
        %s344 = smul.addr %s343, 8
        %s345 = scalar_lea.vmem %s0, %s344
        %p346 = pneg %p43
        %p347 = pneg %p40
        %p348 = pneg %p64
        %p349 = pneg %p61
        %p350 = pneg %p85
        %p351 = pneg %p82
        %p352 = pneg %p106
        %p353 = pneg %p103
        %p354 = pneg %p127
        %p355 = pneg %p124
        %p356 = pneg %p148
        %p357 = pneg %p145
        %p358 = pneg %p169
        %p359 = pneg %p166
        %p360 = pneg %p190
        %p361 = pneg %p187
        %p362 = pneg %p211
        %p363 = pneg %p208
        %p364 = pneg %p237
        %p365 = pneg %p234
        %p366 = scmp.lt.s32.totalorder %s22, 3
        %s367 = scalar_select %p366, %s22, 3
        %s368 = smul.addr %s367, 2
        %s369 = scalar_lea.vmem %s9, %s368
        %p370 = scmp.lt.s32.totalorder %s22, 3
        %s371 = scalar_select %p370, %s22, 3
        %s372 = smul.addr %s371, 8
        %s373 = scalar_lea.vmem %s0, %s372
        %p374 = scmp.lt.s32.totalorder %s22, 3
        %s375 = scalar_select %p374, %s22, 3
        %s376 = smul.addr %s375, 2
        %s377 = scalar_lea.vmem %s9, %s376
        %v378 = vld [vmem:[%s373] sm:$0xff]
        %v379 = vlaneseq
        %v380 = vand.u32 %v379, 127
        %381 = vset.pattern.permute.xlu0 0
        %382 = vperm.xlu0 %381, %v378
        %v383 = vpop.permute.xlu0 %382
        %vm384 = vcmp.eq.s32.totalorder %v380, %v383
        %385 = vset.pattern.permute.xlu0 1
        %386 = vperm.xlu0 %385, %v378
        %v387 = vpop.permute.xlu0 %386
        %vm388 = vcmp.eq.s32.totalorder %v380, %v387
        %vm389 = vmor %vm384, %vm388
        %v390 = vsel %vm389, 1, 0
        %v391 = vcvt.s32.f32 %v390
        %v392 = vld [vmem:[%s1] sm:$0xff]
        %v393 = vld [vmem:[%s1 + $0x8] sm:$0xff]
        %v394 = vld [vmem:[%s1 + $0x10] sm:$0xff]
        %v395 = vld [vmem:[%s1 + $0x18] sm:$0xff]
        %vm396 = vcmask 261120
        %v398 = vsel %vm396, %v391, 0
        %400 = vmatpush.msra.mxu0 0.0
        %401 = vmatpush.msra.mxu0 0.0
        %402 = vmatpush.msra.mxu0 0.0
        %403 = vmatpush.msra.mxu0 0.0
        %404 = vmatpush.msra.mxu0 0.0
        %405 = vmatpush.msra.mxu0 0.0
        %406 = vmatpush.msra.mxu0 0.0
        %407 = vmatpush.msra.mxu0 0.0
        %408 = vmatpush.msra.mxu0 0.0
        %409 = vmatpush.msra.mxu0 0.0
        %410 = vmatpush.msra.mxu0 0.0
        %411 = vmatpush.msra.mxu0 0.0
        %412 = vmatpush.msra.mxu0 %v395
        %413 = vmatpush.msra.mxu0 %v394
        %414 = vmatpush.msra.mxu0 %v393
        %415 = vmatpush.msra.mxu0 %v392
        %416 = vmatmul.f32.gmra.mxu0 %v398
        %v417 = vpop.f32.mrf.mxu0
        %v418 = vadd.f32 0.0, %v417
        %419 = vdwg.mxu0
        %v420 = vsel %vm396, %v418, 0.0
        %421 = vadd.xlane.f32.xlu0 %v420
        %v422 = vpop.xlane.xlu0 %421
        %v423 = vrcp.pop 32.0
        %v424 = vmul.f32 32.0, %v423
        %v425 = vsub.f32 1.0, %v424
        %v426 = vmul.f32 %v423, %v425
        %v427 = vadd.f32 %v423, %v426
        %vm428 = vweird.f32 %v423
        %v429 = vsel %vm428, %v423, %v427
        %v430 = vmul.f32 %v422, %v429
        %v431 = vmul.f32 %v418, %v418
        %v432 = vsel %vm396, %v431, 0.0
        %433 = vadd.xlane.f32.xlu0 %v432
        %v434 = vpop.xlane.xlu0 %433
        %v435 = vmul.f32 %v434, %v429
        %v436 = vmul.f32 %v430, %v430
        %v437 = vsub.f32 %v435, %v436
        %v438 = vmax.f32 %v437, 0.0
        %v439 = vld [vmem:[%s2] sm:$0x1]
        %v440 = vadd.f32 %v438, 1e-05
        %v441 = vrsqrt.pop %v440
        %v442 = vmul.f32 %v441, %v440
        %v443 = vmul.f32 %v442, %v441
        %v444 = vmul.f32 0.5, %v443
        %v445 = vsub.f32 1.5, %v444
        %v446 = vmul.f32 %v441, %v445
        %vm447 = vweird.f32 %v440
        %vm448 = vweird.f32 %v441
        %vm449 = vmor %vm447, %vm448
        %v450 = vsel %vm449, %v441, %v446
        %v452 = vperm.slane %v439, 0
        %v454 = vmul.f32 %v452, %v450
        %v455 = vsub.f32 %v418, %v430
        %v456 = vmul.f32 %v455, %v454
        %v457 = vld [vmem:[%s3] sm:$0x1]
        %v459 = vperm.slane %v457, 0
        %v461 = vadd.f32 %v456, %v459
        %v462 = vmax.f32 %v461, 0.0
        %v463 = vld [vmem:[#allocation2] sm:$0xff]
        %v464 = vld [vmem:[#allocation2 + $0x8] sm:$0xff]
        %v465 = vld [vmem:[#allocation2 + $0x10] sm:$0xff]
        %v466 = vld [vmem:[#allocation2 + $0x18] sm:$0xff]
        %v467 = vld [vmem:[#allocation2 + $0x20] sm:$0xff]
        %v468 = vld [vmem:[#allocation2 + $0x28] sm:$0xff]
        %v469 = vld [vmem:[#allocation2 + $0x30] sm:$0xff]
        %v470 = vld [vmem:[#allocation2 + $0x38] sm:$0xff]
        %v472 = vsel %vm396, %v462, 0
        %474 = vmatpush.msra.mxu0 0.0
        %475 = vmatpush.msra.mxu0 0.0
        %476 = vmatpush.msra.mxu0 0.0
        %477 = vmatpush.msra.mxu0 0.0
        %478 = vmatpush.msra.mxu0 0.0
        %479 = vmatpush.msra.mxu0 0.0
        %480 = vmatpush.msra.mxu0 0.0
        %481 = vmatpush.msra.mxu0 0.0
        %482 = vmatpush.msra.mxu0 0.0
        %483 = vmatpush.msra.mxu0 0.0
        %484 = vmatpush.msra.mxu0 0.0
        %485 = vmatpush.msra.mxu0 0.0
        %486 = vmatpush.msra.mxu0 %v469
        %487 = vmatpush.msra.mxu0 %v467
        %488 = vmatpush.msra.mxu0 %v465
        %489 = vmatpush.msra.mxu0 %v463
        %490 = vmatmul.f32.gmra.mxu0 %v472
        %v491 = vpop.f32.mrf.mxu0
        %v492 = vadd.f32 0.0, %v491
        %493 = vdwg.mxu0
        %494 = vmatpush.msra.mxu0 0.0
        %495 = vmatpush.msra.mxu0 0.0
        %496 = vmatpush.msra.mxu0 0.0
        %497 = vmatpush.msra.mxu0 0.0
        %498 = vmatpush.msra.mxu0 0.0
        %499 = vmatpush.msra.mxu0 0.0
        %500 = vmatpush.msra.mxu0 0.0
        %501 = vmatpush.msra.mxu0 0.0
        %502 = vmatpush.msra.mxu0 0.0
        %503 = vmatpush.msra.mxu0 0.0
        %504 = vmatpush.msra.mxu0 0.0
        %505 = vmatpush.msra.mxu0 0.0
        %506 = vmatpush.msra.mxu0 %v470
        %507 = vmatpush.msra.mxu0 %v468
        %508 = vmatpush.msra.mxu0 %v466
        %509 = vmatpush.msra.mxu0 %v464
        %510 = vmatmul.f32.gmra.mxu0 %v472
        %v511 = vpop.f32.mrf.mxu0
        %v512 = vadd.f32 0.0, %v511
        %513 = vdwg.mxu0
        %v514 = vlaneseq
        %v515 = vshrl.u32 %v514, 7
        %v516 = vadd.s32 %v515, %v380
        %vm517 = vcmp.eq.s32.totalorder %v516, 7
        %v518 = vsel %vm517, 1, 0
        %v519 = vcvt.s32.f32 %v518
        %vm520 = vcmask 64512
        %v522 = vsel %vm520, %v519, 0
        %524 = vmatpush.msra.mxu0 0.0
        %525 = vmatpush.msra.mxu0 0.0
        %526 = vmatpush.msra.mxu0 0.0
        %527 = vmatpush.msra.mxu0 0.0
        %528 = vmatpush.msra.mxu0 0.0
        %529 = vmatpush.msra.mxu0 0.0
        %530 = vmatpush.msra.mxu0 0.0
        %531 = vmatpush.msra.mxu0 0.0
        %532 = vmatpush.msra.mxu0 0.0
        %533 = vmatpush.msra.mxu0 0.0
        %534 = vmatpush.msra.mxu0 0.0
        %535 = vmatpush.msra.mxu0 0.0
        %536 = vmatpush.msra.mxu0 0.0
        %537 = vmatpush.msra.mxu0 0.0
        %538 = vmatpush.msra.mxu0 0.0
        %539 = vmatpush.msra.mxu0 %v492
        %540 = vmatmul.f32.gmra.mxu0 %v522
        %v541 = vpop.f32.mrf.mxu0
        %v542 = vadd.f32 0.0, %v541
        %543 = vdwg.mxu0
        %544 = vmatpush.msra.mxu0 0.0
        %545 = vmatpush.msra.mxu0 0.0
        %546 = vmatpush.msra.mxu0 0.0
        %547 = vmatpush.msra.mxu0 0.0
        %548 = vmatpush.msra.mxu0 0.0
        %549 = vmatpush.msra.mxu0 0.0
        %550 = vmatpush.msra.mxu0 0.0
        %551 = vmatpush.msra.mxu0 0.0
        %552 = vmatpush.msra.mxu0 0.0
        %553 = vmatpush.msra.mxu0 0.0
        %554 = vmatpush.msra.mxu0 0.0
        %555 = vmatpush.msra.mxu0 0.0
        %556 = vmatpush.msra.mxu0 0.0
        %557 = vmatpush.msra.mxu0 0.0
        %558 = vmatpush.msra.mxu0 0.0
        %559 = vmatpush.msra.mxu0 %v512
        %560 = vmatmul.f32.gmra.mxu0 %v522
        %v561 = vpop.f32.mrf.mxu0
        %v562 = vadd.f32 0.0, %v561
        %563 = vdwg.mxu0
        %v564 = vadd.s32 %v380, 128
        %vm565 = vcmp.lt.s32.totalorder %v380, 0
        %v566 = vsub.s32 0, %v380
        %v567 = vsel %vm565, %v566, %v380
        %v568 = vshrl.u32 %v567, 6
        %v569 = vand.u32 %v567, 63
        %v570 = vsub.s32 0, %v569
        %v571 = vsel %vm565, %v570, %v569
        %vm572 = vcmp.lt.s32.totalorder %v564, 0
        %v573 = vsub.s32 0, %v564
        %v574 = vsel %vm572, %v573, %v564
        %v575 = vshrl.u32 %v574, 6
        %v576 = vand.u32 %v574, 63
        %v577 = vsub.s32 0, %v576
        %v578 = vsel %vm572, %v577, %v576
        %vm579 = vcmp.ne.s32.totalorder %v571, 0
        %vm580 = vcmp.ne.s32.totalorder %v578, 0
        %vm581 = vcmp.lt.s32.totalorder %v571, 0
        %vm582 = vcmp.lt.s32.totalorder %v578, 0
        %vm583 = vmand %vm581, %vm579
        %vm584 = vmand %vm582, %vm580
        %v585 = vadd.s32 %v571, 64
        %v586 = vadd.s32 %v578, 64
        %v587 = vsel %vm583, %v585, %v571
        %v588 = vsel %vm584, %v586, %v578
        %vm589 = vcmp.lt.s32.totalorder %v587, 32
        %vm590 = vcmp.lt.s32.totalorder %v588, 32
        %v591 = vsel %vm589, %v492, %v542
        %v592 = vsel %vm590, %v512, %v562
        %v593 = vld [vmem:[%s6] sm:$0x3]
        %v595 = vperm.slane %v593, 0
        %v596 = vperm.slane %v593, 1
        %v599 = vadd.f32 %v591, %v595
        %v600 = vadd.f32 %v592, %v596
        %vm601 = vcmp.lt.s32.totalorder %v380, 64
        %v602 = vld [vmem:[#allocation4] sm:$0xff]
        %v603 = vld [vmem:[#allocation4 + $0x8] sm:$0xff]
        %v604 = vld [vmem:[#allocation4 + $0x10] sm:$0xff]
        %v605 = vld [vmem:[#allocation4 + $0x18] sm:$0xff]
        %v606 = vld [vmem:[#allocation4 + $0x20] sm:$0xff]
        %v607 = vld [vmem:[#allocation4 + $0x28] sm:$0xff]
        %v608 = vld [vmem:[#allocation4 + $0x30] sm:$0xff]
        %v609 = vld [vmem:[#allocation4 + $0x38] sm:$0xff]
        %v610 = vld [vmem:[#allocation4 + $0x40] sm:$0xff]
        %v611 = vld [vmem:[#allocation4 + $0x48] sm:$0xff]
        %v612 = vld [vmem:[#allocation4 + $0x50] sm:$0xff]
        %v613 = vld [vmem:[#allocation4 + $0x58] sm:$0xff]
        %v614 = vld [vmem:[#allocation4 + $0x60] sm:$0xff]
        %v615 = vld [vmem:[#allocation4 + $0x68] sm:$0xff]
        %v616 = vld [vmem:[#allocation4 + $0x70] sm:$0xff]
        %v617 = vld [vmem:[#allocation4 + $0x78] sm:$0xff]
        %vm618 = vcmask 523264
        %v620 = vsel %vm618, 0.0, 0
        %622 = vmatpush.msra.mxu0 0.0
        %623 = vmatpush.msra.mxu0 0.0
        %624 = vmatpush.msra.mxu0 0.0
        %625 = vmatpush.msra.mxu0 0.0
        %626 = vmatpush.msra.mxu0 0.0
        %627 = vmatpush.msra.mxu0 0.0
        %628 = vmatpush.msra.mxu0 0.0
        %629 = vmatpush.msra.mxu0 0.0
        %630 = vmatpush.msra.mxu0 %v616
        %631 = vmatpush.msra.mxu0 %v614
        %632 = vmatpush.msra.mxu0 %v612
        %633 = vmatpush.msra.mxu0 %v610
        %634 = vmatpush.msra.mxu0 %v608
        %635 = vmatpush.msra.mxu0 %v606
        %636 = vmatpush.msra.mxu0 %v604
        %637 = vmatpush.msra.mxu0 %v602
        %638 = vmatmul.f32.gmra.mxu0 %v620
        %v639 = vpop.f32.mrf.mxu0
        %v640 = vadd.f32 0.0, %v639
        %641 = vdwg.mxu0
        %642 = vmatpush.msra.mxu0 0.0
        %643 = vmatpush.msra.mxu0 0.0
        %644 = vmatpush.msra.mxu0 0.0
        %645 = vmatpush.msra.mxu0 0.0
        %646 = vmatpush.msra.mxu0 0.0
        %647 = vmatpush.msra.mxu0 0.0
        %648 = vmatpush.msra.mxu0 0.0
        %649 = vmatpush.msra.mxu0 0.0
        %650 = vmatpush.msra.mxu0 %v617
        %651 = vmatpush.msra.mxu0 %v615
        %652 = vmatpush.msra.mxu0 %v613
        %653 = vmatpush.msra.mxu0 %v611
        %654 = vmatpush.msra.mxu0 %v609
        %655 = vmatpush.msra.mxu0 %v607
        %656 = vmatpush.msra.mxu0 %v605
        %657 = vmatpush.msra.mxu0 %v603
        %658 = vmatmul.f32.gmra.mxu0 %v620
        %v659 = vpop.f32.mrf.mxu0
        %v660 = vadd.f32 0.0, %v659
        %661 = vdwg.mxu0
        %v662 = vadd.f32 %v599, %v640
        %v663 = vadd.f32 %v600, %v660
        %v664 = vxor.u32 %v662, 2147483648
        %v665 = vmul.f32 %v664, 1.442695
        %v666 = vpow.pop %v665
        %v667 = vadd.f32 %v666, 1.0
        %v668 = vrcp.pop %v667
        %v669 = vmul.f32 %v667, %v668
        %v670 = vsub.f32 1.0, %v669
        %v671 = vmul.f32 %v668, %v670
        %v672 = vadd.f32 %v668, %v671
        %vm673 = vweird.f32 %v667
        %vm674 = vweird.f32 %v668
        %vm675 = vmor %vm673, %vm674
        %v676 = vsel %vm675, %v668, %v672
        %v677 = vand.u32 2147483647, %v667
        %vm678 = vcmp.eq.f32.partialorder %v677, 8.507059e+37
        %v679 = vand.u32 %v667, 2147483648
        %v680 = vor.u32 1.1754944e-38, %v679
        %v681 = vsel %vm678, %v680, %v676
        %v682 = vmul.f32 1.0, %v681
        %v683 = vtanh.pop %v663
        %v684 = vxor.u32 %v663, 2147483648
        %v685 = vmul.f32 %v684, 1.442695
        %v686 = vpow.pop %v685
        %v687 = vadd.f32 %v686, 1.0
        %v688 = vrcp.pop %v687
        %v689 = vmul.f32 %v687, %v688
        %v690 = vsub.f32 1.0, %v689
        %v691 = vmul.f32 %v688, %v690
        %v692 = vadd.f32 %v688, %v691
        %vm693 = vweird.f32 %v687
        %vm694 = vweird.f32 %v688
        %vm695 = vmor %vm693, %vm694
        %v696 = vsel %vm695, %v688, %v692
        %v697 = vand.u32 2147483647, %v687
        %vm698 = vcmp.eq.f32.partialorder %v697, 8.507059e+37
        %v699 = vand.u32 %v687, 2147483648
        %v700 = vor.u32 1.1754944e-38, %v699
        %v701 = vsel %vm698, %v700, %v696
        %v702 = vmul.f32 1.0, %v701
        %v703 = vsel %vm601, %v683, %v702
        %v704 = vmul.f32 %v682, 0.0
        %v705 = vmul.f32 %v682, %v703
        %707 = vrot.lane.b32.xlu0 %v705, 64
        %v708 = vpop.permute.xlu0 %707
        %v710 = vadd.f32 %v704, %v708
        %v711 = vtanh.pop %v710
        %v712 = vmul.f32 %v703, %v711
        %714 = vrot.lane.b32.xlu0 %v712, 64
        %v715 = vpop.permute.xlu0 %714
        %v716 = vsel %vm618, %v715, 0
        %718 = vmatpush.msra.mxu0 0.0
        %719 = vmatpush.msra.mxu0 0.0
        %720 = vmatpush.msra.mxu0 0.0
        %721 = vmatpush.msra.mxu0 0.0
        %722 = vmatpush.msra.mxu0 0.0
        %723 = vmatpush.msra.mxu0 0.0
        %724 = vmatpush.msra.mxu0 0.0
        %725 = vmatpush.msra.mxu0 0.0
        %726 = vmatpush.msra.mxu0 %v616
        %727 = vmatpush.msra.mxu0 %v614
        %728 = vmatpush.msra.mxu0 %v612
        %729 = vmatpush.msra.mxu0 %v610
        %730 = vmatpush.msra.mxu0 %v608
        %731 = vmatpush.msra.mxu0 %v606
        %732 = vmatpush.msra.mxu0 %v604
        %733 = vmatpush.msra.mxu0 %v602
        %734 = vmatmul.f32.gmra.mxu0 %v716
        %v735 = vpop.f32.mrf.mxu0
        %v736 = vadd.f32 0.0, %v735
        %737 = vdwg.mxu0
        %738 = vmatpush.msra.mxu0 0.0
        %739 = vmatpush.msra.mxu0 0.0
        %740 = vmatpush.msra.mxu0 0.0
        %741 = vmatpush.msra.mxu0 0.0
        %742 = vmatpush.msra.mxu0 0.0
        %743 = vmatpush.msra.mxu0 0.0
        %744 = vmatpush.msra.mxu0 0.0
        %745 = vmatpush.msra.mxu0 0.0
        %746 = vmatpush.msra.mxu0 %v617
        %747 = vmatpush.msra.mxu0 %v615
        %748 = vmatpush.msra.mxu0 %v613
        %749 = vmatpush.msra.mxu0 %v611
        %750 = vmatpush.msra.mxu0 %v609
        %751 = vmatpush.msra.mxu0 %v607
        %752 = vmatpush.msra.mxu0 %v605
        %753 = vmatpush.msra.mxu0 %v603
        %754 = vmatmul.f32.gmra.mxu0 %v716
        %v755 = vpop.f32.mrf.mxu0
        %v756 = vadd.f32 0.0, %v755
        %757 = vdwg.mxu0
        %v760 = vrot.slane %v736, 7
        %v761 = vrot.slane %v756, 7
        %v764 = vadd.f32 %v599, %v760
        %v765 = vadd.f32 %v600, %v761
        %v766 = vxor.u32 %v764, 2147483648
        %v767 = vmul.f32 %v766, 1.442695
        %v768 = vpow.pop %v767
        %v769 = vadd.f32 %v768, 1.0
        %v770 = vrcp.pop %v769
        %v771 = vmul.f32 %v769, %v770
        %v772 = vsub.f32 1.0, %v771
        %v773 = vmul.f32 %v770, %v772
        %v774 = vadd.f32 %v770, %v773
        %vm775 = vweird.f32 %v769
        %vm776 = vweird.f32 %v770
        %vm777 = vmor %vm775, %vm776
        %v778 = vsel %vm777, %v770, %v774
        %v779 = vand.u32 2147483647, %v769
        %vm780 = vcmp.eq.f32.partialorder %v779, 8.507059e+37
        %v781 = vand.u32 %v769, 2147483648
        %v782 = vor.u32 1.1754944e-38, %v781
        %v783 = vsel %vm780, %v782, %v778
        %v784 = vmul.f32 1.0, %v783
        %v785 = vtanh.pop %v765
        %v786 = vxor.u32 %v765, 2147483648
        %v787 = vmul.f32 %v786, 1.442695
        %v788 = vpow.pop %v787
        %v789 = vadd.f32 %v788, 1.0
        %v790 = vrcp.pop %v789
        %v791 = vmul.f32 %v789, %v790
        %v792 = vsub.f32 1.0, %v791
        %v793 = vmul.f32 %v790, %v792
        %v794 = vadd.f32 %v790, %v793
        %vm795 = vweird.f32 %v789
        %vm796 = vweird.f32 %v790
        %vm797 = vmor %vm795, %vm796
        %v798 = vsel %vm797, %v790, %v794
        %v799 = vand.u32 2147483647, %v789
        %vm800 = vcmp.eq.f32.partialorder %v799, 8.507059e+37
        %v801 = vand.u32 %v789, 2147483648
        %v802 = vor.u32 1.1754944e-38, %v801
        %v803 = vsel %vm800, %v802, %v798
        %v804 = vmul.f32 1.0, %v803
        %v805 = vsel %vm601, %v785, %v804
        %v807 = vrot.slane %v710, 7
        %v809 = vmul.f32 %v784, %v807
        %v810 = vmul.f32 %v784, %v805
        %812 = vrot.lane.b32.xlu0 %v810, 64
        %v813 = vpop.permute.xlu0 %812
        %v815 = vadd.f32 %v809, %v813
        %v816 = vtanh.pop %v815
        %v817 = vmul.f32 %v805, %v816
        %v819 = vrot.slane %v817, 1
        %820 = vrot.lane.b32.xlu0 %v819, 64
        %v821 = vpop.permute.xlu0 %820
        %v822 = vsel %vm618, %v821, 0
        %824 = vmatpush.msra.mxu0 0.0
        %825 = vmatpush.msra.mxu0 0.0
        %826 = vmatpush.msra.mxu0 0.0
        %827 = vmatpush.msra.mxu0 0.0
        %828 = vmatpush.msra.mxu0 0.0
        %829 = vmatpush.msra.mxu0 0.0
        %830 = vmatpush.msra.mxu0 0.0
        %831 = vmatpush.msra.mxu0 0.0
        %832 = vmatpush.msra.mxu0 %v616
        %833 = vmatpush.msra.mxu0 %v614
        %834 = vmatpush.msra.mxu0 %v612
        %835 = vmatpush.msra.mxu0 %v610
        %836 = vmatpush.msra.mxu0 %v608
        %837 = vmatpush.msra.mxu0 %v606
        %838 = vmatpush.msra.mxu0 %v604
        %839 = vmatpush.msra.mxu0 %v602
        %840 = vmatmul.f32.gmra.mxu0 %v822
        %v841 = vpop.f32.mrf.mxu0
        %v842 = vadd.f32 0.0, %v841
        %843 = vdwg.mxu0
        %844 = vmatpush.msra.mxu0 0.0
        %845 = vmatpush.msra.mxu0 0.0
        %846 = vmatpush.msra.mxu0 0.0
        %847 = vmatpush.msra.mxu0 0.0
        %848 = vmatpush.msra.mxu0 0.0
        %849 = vmatpush.msra.mxu0 0.0
        %850 = vmatpush.msra.mxu0 0.0
        %851 = vmatpush.msra.mxu0 0.0
        %852 = vmatpush.msra.mxu0 %v617
        %853 = vmatpush.msra.mxu0 %v615
        %854 = vmatpush.msra.mxu0 %v613
        %855 = vmatpush.msra.mxu0 %v611
        %856 = vmatpush.msra.mxu0 %v609
        %857 = vmatpush.msra.mxu0 %v607
        %858 = vmatpush.msra.mxu0 %v605
        %859 = vmatpush.msra.mxu0 %v603
        %860 = vmatmul.f32.gmra.mxu0 %v822
        %v861 = vpop.f32.mrf.mxu0
        %v862 = vadd.f32 0.0, %v861
        %863 = vdwg.mxu0
        %v866 = vrot.slane %v842, 6
        %v867 = vrot.slane %v862, 6
        %v870 = vadd.f32 %v599, %v866
        %v871 = vadd.f32 %v600, %v867
        %v872 = vxor.u32 %v870, 2147483648
        %v873 = vmul.f32 %v872, 1.442695
        %v874 = vpow.pop %v873
        %v875 = vadd.f32 %v874, 1.0
        %v876 = vrcp.pop %v875
        %v877 = vmul.f32 %v875, %v876
        %v878 = vsub.f32 1.0, %v877
        %v879 = vmul.f32 %v876, %v878
        %v880 = vadd.f32 %v876, %v879
        %vm881 = vweird.f32 %v875
        %vm882 = vweird.f32 %v876
        %vm883 = vmor %vm881, %vm882
        %v884 = vsel %vm883, %v876, %v880
        %v885 = vand.u32 2147483647, %v875
        %vm886 = vcmp.eq.f32.partialorder %v885, 8.507059e+37
        %v887 = vand.u32 %v875, 2147483648
        %v888 = vor.u32 1.1754944e-38, %v887
        %v889 = vsel %vm886, %v888, %v884
        %v890 = vmul.f32 1.0, %v889
        %v891 = vtanh.pop %v871
        %v892 = vxor.u32 %v871, 2147483648
        %v893 = vmul.f32 %v892, 1.442695
        %v894 = vpow.pop %v893
        %v895 = vadd.f32 %v894, 1.0
        %v896 = vrcp.pop %v895
        %v897 = vmul.f32 %v895, %v896
        %v898 = vsub.f32 1.0, %v897
        %v899 = vmul.f32 %v896, %v898
        %v900 = vadd.f32 %v896, %v899
        %vm901 = vweird.f32 %v895
        %vm902 = vweird.f32 %v896
        %vm903 = vmor %vm901, %vm902
        %v904 = vsel %vm903, %v896, %v900
        %v905 = vand.u32 2147483647, %v895
        %vm906 = vcmp.eq.f32.partialorder %v905, 8.507059e+37
        %v907 = vand.u32 %v895, 2147483648
        %v908 = vor.u32 1.1754944e-38, %v907
        %v909 = vsel %vm906, %v908, %v904
        %v910 = vmul.f32 1.0, %v909
        %v911 = vsel %vm601, %v891, %v910
        %v913 = vrot.slane %v815, 7
        %v915 = vmul.f32 %v890, %v913
        %v916 = vmul.f32 %v890, %v911
        %918 = vrot.lane.b32.xlu0 %v916, 64
        %v919 = vpop.permute.xlu0 %918
        %v921 = vadd.f32 %v915, %v919
        %v922 = vtanh.pop %v921
        %v923 = vmul.f32 %v911, %v922
        %v925 = vrot.slane %v923, 2
        %926 = vrot.lane.b32.xlu0 %v925, 64
        %v927 = vpop.permute.xlu0 %926
        %v928 = vsel %vm618, %v927, 0
        %930 = vmatpush.msra.mxu0 0.0
        %931 = vmatpush.msra.mxu0 0.0
        %932 = vmatpush.msra.mxu0 0.0
        %933 = vmatpush.msra.mxu0 0.0
        %934 = vmatpush.msra.mxu0 0.0
        %935 = vmatpush.msra.mxu0 0.0
        %936 = vmatpush.msra.mxu0 0.0
        %937 = vmatpush.msra.mxu0 0.0
        %938 = vmatpush.msra.mxu0 %v616
        %939 = vmatpush.msra.mxu0 %v614
        %940 = vmatpush.msra.mxu0 %v612
        %941 = vmatpush.msra.mxu0 %v610
        %942 = vmatpush.msra.mxu0 %v608
        %943 = vmatpush.msra.mxu0 %v606
        %944 = vmatpush.msra.mxu0 %v604
        %945 = vmatpush.msra.mxu0 %v602
        %946 = vmatmul.f32.gmra.mxu0 %v928
        %v947 = vpop.f32.mrf.mxu0
        %v948 = vadd.f32 0.0, %v947
        %949 = vdwg.mxu0
        %950 = vmatpush.msra.mxu0 0.0
        %951 = vmatpush.msra.mxu0 0.0
        %952 = vmatpush.msra.mxu0 0.0
        %953 = vmatpush.msra.mxu0 0.0
        %954 = vmatpush.msra.mxu0 0.0
        %955 = vmatpush.msra.mxu0 0.0
        %956 = vmatpush.msra.mxu0 0.0
        %957 = vmatpush.msra.mxu0 0.0
        %958 = vmatpush.msra.mxu0 %v617
        %959 = vmatpush.msra.mxu0 %v615
        %960 = vmatpush.msra.mxu0 %v613
        %961 = vmatpush.msra.mxu0 %v611
        %962 = vmatpush.msra.mxu0 %v609
        %963 = vmatpush.msra.mxu0 %v607
        %964 = vmatpush.msra.mxu0 %v605
        %965 = vmatpush.msra.mxu0 %v603
        %966 = vmatmul.f32.gmra.mxu0 %v928
        %v967 = vpop.f32.mrf.mxu0
        %v968 = vadd.f32 0.0, %v967
        %969 = vdwg.mxu0
        %v972 = vrot.slane %v948, 5
        %v973 = vrot.slane %v968, 5
        %v976 = vadd.f32 %v599, %v972
        %v977 = vadd.f32 %v600, %v973
        %v978 = vxor.u32 %v976, 2147483648
        %v979 = vmul.f32 %v978, 1.442695
        %v980 = vpow.pop %v979
        %v981 = vadd.f32 %v980, 1.0
        %v982 = vrcp.pop %v981
        %v983 = vmul.f32 %v981, %v982
        %v984 = vsub.f32 1.0, %v983
        %v985 = vmul.f32 %v982, %v984
        %v986 = vadd.f32 %v982, %v985
        %vm987 = vweird.f32 %v981
        %vm988 = vweird.f32 %v982
        %vm989 = vmor %vm987, %vm988
        %v990 = vsel %vm989, %v982, %v986
        %v991 = vand.u32 2147483647, %v981
        %vm992 = vcmp.eq.f32.partialorder %v991, 8.507059e+37
        %v993 = vand.u32 %v981, 2147483648
        %v994 = vor.u32 1.1754944e-38, %v993
        %v995 = vsel %vm992, %v994, %v990
        %v996 = vmul.f32 1.0, %v995
        %v997 = vtanh.pop %v977
        %v998 = vxor.u32 %v977, 2147483648
        %v999 = vmul.f32 %v998, 1.442695
        %v1000 = vpow.pop %v999
        %v1001 = vadd.f32 %v1000, 1.0
        %v1002 = vrcp.pop %v1001
        %v1003 = vmul.f32 %v1001, %v1002
        %v1004 = vsub.f32 1.0, %v1003
        %v1005 = vmul.f32 %v1002, %v1004
        %v1006 = vadd.f32 %v1002, %v1005
        %vm1007 = vweird.f32 %v1001
        %vm1008 = vweird.f32 %v1002
        %vm1009 = vmor %vm1007, %vm1008
        %v1010 = vsel %vm1009, %v1002, %v1006
        %v1011 = vand.u32 2147483647, %v1001
        %vm1012 = vcmp.eq.f32.partialorder %v1011, 8.507059e+37
        %v1013 = vand.u32 %v1001, 2147483648
        %v1014 = vor.u32 1.1754944e-38, %v1013
        %v1015 = vsel %vm1012, %v1014, %v1010
        %v1016 = vmul.f32 1.0, %v1015
        %v1017 = vsel %vm601, %v997, %v1016
        %v1019 = vrot.slane %v921, 7
        %v1021 = vmul.f32 %v996, %v1019
        %v1022 = vmul.f32 %v996, %v1017
        %1024 = vrot.lane.b32.xlu0 %v1022, 64
        %v1025 = vpop.permute.xlu0 %1024
        %v1027 = vadd.f32 %v1021, %v1025
        %v1028 = vtanh.pop %v1027
        %v1029 = vmul.f32 %v1017, %v1028
        %v1031 = vrot.slane %v1029, 3
        %1032 = vrot.lane.b32.xlu0 %v1031, 64
        %v1033 = vpop.permute.xlu0 %1032
        %v1034 = vsel %vm618, %v1033, 0
        %1036 = vmatpush.msra.mxu0 0.0
        %1037 = vmatpush.msra.mxu0 0.0
        %1038 = vmatpush.msra.mxu0 0.0
        %1039 = vmatpush.msra.mxu0 0.0
        %1040 = vmatpush.msra.mxu0 0.0
        %1041 = vmatpush.msra.mxu0 0.0
        %1042 = vmatpush.msra.mxu0 0.0
        %1043 = vmatpush.msra.mxu0 0.0
        %1044 = vmatpush.msra.mxu0 %v616
        %1045 = vmatpush.msra.mxu0 %v614
        %1046 = vmatpush.msra.mxu0 %v612
        %1047 = vmatpush.msra.mxu0 %v610
        %1048 = vmatpush.msra.mxu0 %v608
        %1049 = vmatpush.msra.mxu0 %v606
        %1050 = vmatpush.msra.mxu0 %v604
        %1051 = vmatpush.msra.mxu0 %v602
        %1052 = vmatmul.f32.gmra.mxu0 %v1034
        %v1053 = vpop.f32.mrf.mxu0
        %v1054 = vadd.f32 0.0, %v1053
        %1055 = vdwg.mxu0
        %1056 = vmatpush.msra.mxu0 0.0
        %1057 = vmatpush.msra.mxu0 0.0
        %1058 = vmatpush.msra.mxu0 0.0
        %1059 = vmatpush.msra.mxu0 0.0
        %1060 = vmatpush.msra.mxu0 0.0
        %1061 = vmatpush.msra.mxu0 0.0
        %1062 = vmatpush.msra.mxu0 0.0
        %1063 = vmatpush.msra.mxu0 0.0
        %1064 = vmatpush.msra.mxu0 %v617
        %1065 = vmatpush.msra.mxu0 %v615
        %1066 = vmatpush.msra.mxu0 %v613
        %1067 = vmatpush.msra.mxu0 %v611
        %1068 = vmatpush.msra.mxu0 %v609
        %1069 = vmatpush.msra.mxu0 %v607
        %1070 = vmatpush.msra.mxu0 %v605
        %1071 = vmatpush.msra.mxu0 %v603
        %1072 = vmatmul.f32.gmra.mxu0 %v1034
        %v1073 = vpop.f32.mrf.mxu0
        %v1074 = vadd.f32 0.0, %v1073
        %1075 = vdwg.mxu0
        %v1078 = vrot.slane %v1054, 4
        %v1079 = vrot.slane %v1074, 4
        %v1082 = vadd.f32 %v599, %v1078
        %v1083 = vadd.f32 %v600, %v1079
        %v1084 = vxor.u32 %v1082, 2147483648
        %v1085 = vmul.f32 %v1084, 1.442695
        %v1086 = vpow.pop %v1085
        %v1087 = vadd.f32 %v1086, 1.0
        %v1088 = vrcp.pop %v1087
        %v1089 = vmul.f32 %v1087, %v1088
        %v1090 = vsub.f32 1.0, %v1089
        %v1091 = vmul.f32 %v1088, %v1090
        %v1092 = vadd.f32 %v1088, %v1091
        %vm1093 = vweird.f32 %v1087
        %vm1094 = vweird.f32 %v1088
        %vm1095 = vmor %vm1093, %vm1094
        %v1096 = vsel %vm1095, %v1088, %v1092
        %v1097 = vand.u32 2147483647, %v1087
        %vm1098 = vcmp.eq.f32.partialorder %v1097, 8.507059e+37
        %v1099 = vand.u32 %v1087, 2147483648
        %v1100 = vor.u32 1.1754944e-38, %v1099
        %v1101 = vsel %vm1098, %v1100, %v1096
        %v1102 = vmul.f32 1.0, %v1101
        %v1103 = vtanh.pop %v1083
        %v1104 = vxor.u32 %v1083, 2147483648
        %v1105 = vmul.f32 %v1104, 1.442695
        %v1106 = vpow.pop %v1105
        %v1107 = vadd.f32 %v1106, 1.0
        %v1108 = vrcp.pop %v1107
        %v1109 = vmul.f32 %v1107, %v1108
        %v1110 = vsub.f32 1.0, %v1109
        %v1111 = vmul.f32 %v1108, %v1110
        %v1112 = vadd.f32 %v1108, %v1111
        %vm1113 = vweird.f32 %v1107
        %vm1114 = vweird.f32 %v1108
        %vm1115 = vmor %vm1113, %vm1114
        %v1116 = vsel %vm1115, %v1108, %v1112
        %v1117 = vand.u32 2147483647, %v1107
        %vm1118 = vcmp.eq.f32.partialorder %v1117, 8.507059e+37
        %v1119 = vand.u32 %v1107, 2147483648
        %v1120 = vor.u32 1.1754944e-38, %v1119
        %v1121 = vsel %vm1118, %v1120, %v1116
        %v1122 = vmul.f32 1.0, %v1121
        %v1123 = vsel %vm601, %v1103, %v1122
        %v1125 = vrot.slane %v1027, 7
        %v1127 = vmul.f32 %v1102, %v1125
        %v1128 = vmul.f32 %v1102, %v1123
        %1130 = vrot.lane.b32.xlu0 %v1128, 64
        %v1131 = vpop.permute.xlu0 %1130
        %v1133 = vadd.f32 %v1127, %v1131
        %v1134 = vtanh.pop %v1133
        %v1135 = vmul.f32 %v1123, %v1134
        %v1137 = vrot.slane %v1135, 4
        %1138 = vrot.lane.b32.xlu0 %v1137, 64
        %v1139 = vpop.permute.xlu0 %1138
        %v1140 = vsel %vm618, %v1139, 0
        %1142 = vmatpush.msra.mxu0 0.0
        %1143 = vmatpush.msra.mxu0 0.0
        %1144 = vmatpush.msra.mxu0 0.0
        %1145 = vmatpush.msra.mxu0 0.0
        %1146 = vmatpush.msra.mxu0 0.0
        %1147 = vmatpush.msra.mxu0 0.0
        %1148 = vmatpush.msra.mxu0 0.0
        %1149 = vmatpush.msra.mxu0 0.0
        %1150 = vmatpush.msra.mxu0 %v616
        %1151 = vmatpush.msra.mxu0 %v614
        %1152 = vmatpush.msra.mxu0 %v612
        %1153 = vmatpush.msra.mxu0 %v610
        %1154 = vmatpush.msra.mxu0 %v608
        %1155 = vmatpush.msra.mxu0 %v606
        %1156 = vmatpush.msra.mxu0 %v604
        %1157 = vmatpush.msra.mxu0 %v602
        %1158 = vmatmul.f32.gmra.mxu0 %v1140
        %v1159 = vpop.f32.mrf.mxu0
        %v1160 = vadd.f32 0.0, %v1159
        %1161 = vdwg.mxu0
        %1162 = vmatpush.msra.mxu0 0.0
        %1163 = vmatpush.msra.mxu0 0.0
        %1164 = vmatpush.msra.mxu0 0.0
        %1165 = vmatpush.msra.mxu0 0.0
        %1166 = vmatpush.msra.mxu0 0.0
        %1167 = vmatpush.msra.mxu0 0.0
        %1168 = vmatpush.msra.mxu0 0.0
        %1169 = vmatpush.msra.mxu0 0.0
        %1170 = vmatpush.msra.mxu0 %v617
        %1171 = vmatpush.msra.mxu0 %v615
        %1172 = vmatpush.msra.mxu0 %v613
        %1173 = vmatpush.msra.mxu0 %v611
        %1174 = vmatpush.msra.mxu0 %v609
        %1175 = vmatpush.msra.mxu0 %v607
        %1176 = vmatpush.msra.mxu0 %v605
        %1177 = vmatpush.msra.mxu0 %v603
        %1178 = vmatmul.f32.gmra.mxu0 %v1140
        %v1179 = vpop.f32.mrf.mxu0
        %v1180 = vadd.f32 0.0, %v1179
        %1181 = vdwg.mxu0
        %v1184 = vrot.slane %v1160, 3
        %v1185 = vrot.slane %v1180, 3
        %v1188 = vadd.f32 %v599, %v1184
        %v1189 = vadd.f32 %v600, %v1185
        %v1190 = vxor.u32 %v1188, 2147483648
        %v1191 = vmul.f32 %v1190, 1.442695
        %v1192 = vpow.pop %v1191
        %v1193 = vadd.f32 %v1192, 1.0
        %v1194 = vrcp.pop %v1193
        %v1195 = vmul.f32 %v1193, %v1194
        %v1196 = vsub.f32 1.0, %v1195
        %v1197 = vmul.f32 %v1194, %v1196
        %v1198 = vadd.f32 %v1194, %v1197
        %vm1199 = vweird.f32 %v1193
        %vm1200 = vweird.f32 %v1194
        %vm1201 = vmor %vm1199, %vm1200
        %v1202 = vsel %vm1201, %v1194, %v1198
        %v1203 = vand.u32 2147483647, %v1193
        %vm1204 = vcmp.eq.f32.partialorder %v1203, 8.507059e+37
        %v1205 = vand.u32 %v1193, 2147483648
        %v1206 = vor.u32 1.1754944e-38, %v1205
        %v1207 = vsel %vm1204, %v1206, %v1202
        %v1208 = vmul.f32 1.0, %v1207
        %v1209 = vtanh.pop %v1189
        %v1210 = vxor.u32 %v1189, 2147483648
        %v1211 = vmul.f32 %v1210, 1.442695
        %v1212 = vpow.pop %v1211
        %v1213 = vadd.f32 %v1212, 1.0
        %v1214 = vrcp.pop %v1213
        %v1215 = vmul.f32 %v1213, %v1214
        %v1216 = vsub.f32 1.0, %v1215
        %v1217 = vmul.f32 %v1214, %v1216
        %v1218 = vadd.f32 %v1214, %v1217
        %vm1219 = vweird.f32 %v1213
        %vm1220 = vweird.f32 %v1214
        %vm1221 = vmor %vm1219, %vm1220
        %v1222 = vsel %vm1221, %v1214, %v1218
        %v1223 = vand.u32 2147483647, %v1213
        %vm1224 = vcmp.eq.f32.partialorder %v1223, 8.507059e+37
        %v1225 = vand.u32 %v1213, 2147483648
        %v1226 = vor.u32 1.1754944e-38, %v1225
        %v1227 = vsel %vm1224, %v1226, %v1222
        %v1228 = vmul.f32 1.0, %v1227
        %v1229 = vsel %vm601, %v1209, %v1228
        %v1231 = vrot.slane %v1133, 7
        %v1233 = vmul.f32 %v1208, %v1231
        %v1234 = vmul.f32 %v1208, %v1229
        %1236 = vrot.lane.b32.xlu0 %v1234, 64
        %v1237 = vpop.permute.xlu0 %1236
        %v1239 = vadd.f32 %v1233, %v1237
        %v1240 = vtanh.pop %v1239
        %v1241 = vmul.f32 %v1229, %v1240
        %v1243 = vrot.slane %v1241, 5
        %1244 = vrot.lane.b32.xlu0 %v1243, 64
        %v1245 = vpop.permute.xlu0 %1244
        %v1246 = vsel %vm618, %v1245, 0
        %1248 = vmatpush.msra.mxu0 0.0
        %1249 = vmatpush.msra.mxu0 0.0
        %1250 = vmatpush.msra.mxu0 0.0
        %1251 = vmatpush.msra.mxu0 0.0
        %1252 = vmatpush.msra.mxu0 0.0
        %1253 = vmatpush.msra.mxu0 0.0
        %1254 = vmatpush.msra.mxu0 0.0
        %1255 = vmatpush.msra.mxu0 0.0
        %1256 = vmatpush.msra.mxu0 %v616
        %1257 = vmatpush.msra.mxu0 %v614
        %1258 = vmatpush.msra.mxu0 %v612
        %1259 = vmatpush.msra.mxu0 %v610
        %1260 = vmatpush.msra.mxu0 %v608
        %1261 = vmatpush.msra.mxu0 %v606
        %1262 = vmatpush.msra.mxu0 %v604
        %1263 = vmatpush.msra.mxu0 %v602
        %1264 = vmatmul.f32.gmra.mxu0 %v1246
        %v1265 = vpop.f32.mrf.mxu0
        %v1266 = vadd.f32 0.0, %v1265
        %1267 = vdwg.mxu0
        %1268 = vmatpush.msra.mxu0 0.0
        %1269 = vmatpush.msra.mxu0 0.0
        %1270 = vmatpush.msra.mxu0 0.0
        %1271 = vmatpush.msra.mxu0 0.0
        %1272 = vmatpush.msra.mxu0 0.0
        %1273 = vmatpush.msra.mxu0 0.0
        %1274 = vmatpush.msra.mxu0 0.0
        %1275 = vmatpush.msra.mxu0 0.0
        %1276 = vmatpush.msra.mxu0 %v617
        %1277 = vmatpush.msra.mxu0 %v615
        %1278 = vmatpush.msra.mxu0 %v613
        %1279 = vmatpush.msra.mxu0 %v611
        %1280 = vmatpush.msra.mxu0 %v609
        %1281 = vmatpush.msra.mxu0 %v607
        %1282 = vmatpush.msra.mxu0 %v605
        %1283 = vmatpush.msra.mxu0 %v603
        %1284 = vmatmul.f32.gmra.mxu0 %v1246
        %v1285 = vpop.f32.mrf.mxu0
        %v1286 = vadd.f32 0.0, %v1285
        %1287 = vdwg.mxu0
        %v1290 = vrot.slane %v1266, 2
        %v1291 = vrot.slane %v1286, 2
        %v1294 = vadd.f32 %v599, %v1290
        %v1295 = vadd.f32 %v600, %v1291
        %v1296 = vxor.u32 %v1294, 2147483648
        %v1297 = vmul.f32 %v1296, 1.442695
        %v1298 = vpow.pop %v1297
        %v1299 = vadd.f32 %v1298, 1.0
        %v1300 = vrcp.pop %v1299
        %v1301 = vmul.f32 %v1299, %v1300
        %v1302 = vsub.f32 1.0, %v1301
        %v1303 = vmul.f32 %v1300, %v1302
        %v1304 = vadd.f32 %v1300, %v1303
        %vm1305 = vweird.f32 %v1299
        %vm1306 = vweird.f32 %v1300
        %vm1307 = vmor %vm1305, %vm1306
        %v1308 = vsel %vm1307, %v1300, %v1304
        %v1309 = vand.u32 2147483647, %v1299
        %vm1310 = vcmp.eq.f32.partialorder %v1309, 8.507059e+37
        %v1311 = vand.u32 %v1299, 2147483648
        %v1312 = vor.u32 1.1754944e-38, %v1311
        %v1313 = vsel %vm1310, %v1312, %v1308
        %v1314 = vmul.f32 1.0, %v1313
        %v1315 = vtanh.pop %v1295
        %v1316 = vxor.u32 %v1295, 2147483648
        %v1317 = vmul.f32 %v1316, 1.442695
        %v1318 = vpow.pop %v1317
        %v1319 = vadd.f32 %v1318, 1.0
        %v1320 = vrcp.pop %v1319
        %v1321 = vmul.f32 %v1319, %v1320
        %v1322 = vsub.f32 1.0, %v1321
        %v1323 = vmul.f32 %v1320, %v1322
        %v1324 = vadd.f32 %v1320, %v1323
        %vm1325 = vweird.f32 %v1319
        %vm1326 = vweird.f32 %v1320
        %vm1327 = vmor %vm1325, %vm1326
        %v1328 = vsel %vm1327, %v1320, %v1324
        %v1329 = vand.u32 2147483647, %v1319
        %vm1330 = vcmp.eq.f32.partialorder %v1329, 8.507059e+37
        %v1331 = vand.u32 %v1319, 2147483648
        %v1332 = vor.u32 1.1754944e-38, %v1331
        %v1333 = vsel %vm1330, %v1332, %v1328
        %v1334 = vmul.f32 1.0, %v1333
        %v1335 = vsel %vm601, %v1315, %v1334
        %v1337 = vrot.slane %v1239, 7
        %v1339 = vmul.f32 %v1314, %v1337
        %v1340 = vmul.f32 %v1314, %v1335
        %1342 = vrot.lane.b32.xlu0 %v1340, 64
        %v1343 = vpop.permute.xlu0 %1342
        %v1345 = vadd.f32 %v1339, %v1343
        %v1346 = vtanh.pop %v1345
        %v1347 = vmul.f32 %v1335, %v1346
        %v1349 = vrot.slane %v1347, 6
        %1350 = vrot.lane.b32.xlu0 %v1349, 64
        %v1351 = vpop.permute.xlu0 %1350
        %v1352 = vsel %vm618, %v1351, 0
        %1354 = vmatpush.msra.mxu0 0.0
        %1355 = vmatpush.msra.mxu0 0.0
        %1356 = vmatpush.msra.mxu0 0.0
        %1357 = vmatpush.msra.mxu0 0.0
        %1358 = vmatpush.msra.mxu0 0.0
        %1359 = vmatpush.msra.mxu0 0.0
        %1360 = vmatpush.msra.mxu0 0.0
        %1361 = vmatpush.msra.mxu0 0.0
        %1362 = vmatpush.msra.mxu0 %v616
        %1363 = vmatpush.msra.mxu0 %v614
        %1364 = vmatpush.msra.mxu0 %v612
        %1365 = vmatpush.msra.mxu0 %v610
        %1366 = vmatpush.msra.mxu0 %v608
        %1367 = vmatpush.msra.mxu0 %v606
        %1368 = vmatpush.msra.mxu0 %v604
        %1369 = vmatpush.msra.mxu0 %v602
        %1370 = vmatmul.f32.gmra.mxu0 %v1352
        %v1371 = vpop.f32.mrf.mxu0
        %v1372 = vadd.f32 0.0, %v1371
        %1373 = vdwg.mxu0
        %1374 = vmatpush.msra.mxu0 0.0
        %1375 = vmatpush.msra.mxu0 0.0
        %1376 = vmatpush.msra.mxu0 0.0
        %1377 = vmatpush.msra.mxu0 0.0
        %1378 = vmatpush.msra.mxu0 0.0
        %1379 = vmatpush.msra.mxu0 0.0
        %1380 = vmatpush.msra.mxu0 0.0
        %1381 = vmatpush.msra.mxu0 0.0
        %1382 = vmatpush.msra.mxu0 %v617
        %1383 = vmatpush.msra.mxu0 %v615
        %1384 = vmatpush.msra.mxu0 %v613
        %1385 = vmatpush.msra.mxu0 %v611
        %1386 = vmatpush.msra.mxu0 %v609
        %1387 = vmatpush.msra.mxu0 %v607
        %1388 = vmatpush.msra.mxu0 %v605
        %1389 = vmatpush.msra.mxu0 %v603
        %1390 = vmatmul.f32.gmra.mxu0 %v1352
        %v1391 = vpop.f32.mrf.mxu0
        %v1392 = vadd.f32 0.0, %v1391
        %1393 = vdwg.mxu0
        %v1396 = vrot.slane %v1372, 1
        %v1397 = vrot.slane %v1392, 1
        %v1400 = vadd.f32 %v599, %v1396
        %v1401 = vadd.f32 %v600, %v1397
        %v1402 = vxor.u32 %v1400, 2147483648
        %v1403 = vmul.f32 %v1402, 1.442695
        %v1404 = vpow.pop %v1403
        %v1405 = vadd.f32 %v1404, 1.0
        %v1406 = vrcp.pop %v1405
        %v1407 = vmul.f32 %v1405, %v1406
        %v1408 = vsub.f32 1.0, %v1407
        %v1409 = vmul.f32 %v1406, %v1408
        %v1410 = vadd.f32 %v1406, %v1409
        %vm1411 = vweird.f32 %v1405
        %vm1412 = vweird.f32 %v1406
        %vm1413 = vmor %vm1411, %vm1412
        %v1414 = vsel %vm1413, %v1406, %v1410
        %v1415 = vand.u32 2147483647, %v1405
        %vm1416 = vcmp.eq.f32.partialorder %v1415, 8.507059e+37
        %v1417 = vand.u32 %v1405, 2147483648
        %v1418 = vor.u32 1.1754944e-38, %v1417
        %v1419 = vsel %vm1416, %v1418, %v1414
        %v1420 = vmul.f32 1.0, %v1419
        %v1421 = vtanh.pop %v1401
        %v1422 = vxor.u32 %v1401, 2147483648
        %v1423 = vmul.f32 %v1422, 1.442695
        %v1424 = vpow.pop %v1423
        %v1425 = vadd.f32 %v1424, 1.0
        %v1426 = vrcp.pop %v1425
        %v1427 = vmul.f32 %v1425, %v1426
        %v1428 = vsub.f32 1.0, %v1427
        %v1429 = vmul.f32 %v1426, %v1428
        %v1430 = vadd.f32 %v1426, %v1429
        %vm1431 = vweird.f32 %v1425
        %vm1432 = vweird.f32 %v1426
        %vm1433 = vmor %vm1431, %vm1432
        %v1434 = vsel %vm1433, %v1426, %v1430
        %v1435 = vand.u32 2147483647, %v1425
        %vm1436 = vcmp.eq.f32.partialorder %v1435, 8.507059e+37
        %v1437 = vand.u32 %v1425, 2147483648
        %v1438 = vor.u32 1.1754944e-38, %v1437
        %v1439 = vsel %vm1436, %v1438, %v1434
        %v1440 = vmul.f32 1.0, %v1439
        %v1441 = vsel %vm601, %v1421, %v1440
        %v1443 = vrot.slane %v1345, 7
        %v1445 = vmul.f32 %v1420, %v1443
        %v1446 = vmul.f32 %v1420, %v1441
        %1448 = vrot.lane.b32.xlu0 %v1446, 64
        %v1449 = vpop.permute.xlu0 %1448
        %v1451 = vadd.f32 %v1445, %v1449
        %v1452 = vtanh.pop %v1451
        %v1453 = vmul.f32 %v1441, %v1452
        %v1454 = vld [vmem:[#allocation6] sm:$0xff]
        %v1455 = vld [vmem:[#allocation6 + $0x8] sm:$0xff]
        %v1456 = vld [vmem:[#allocation6 + $0x10] sm:$0xff]
        %v1457 = vld [vmem:[#allocation6 + $0x18] sm:$0xff]
        %v1458 = vld [vmem:[#allocation6 + $0x20] sm:$0xff]
        %v1459 = vld [vmem:[#allocation6 + $0x28] sm:$0xff]
        %v1460 = vld [vmem:[#allocation6 + $0x30] sm:$0xff]
        %v1461 = vld [vmem:[#allocation6 + $0x38] sm:$0xff]
        %v1462 = vld [vmem:[#allocation6 + $0x40] sm:$0xff]
        %v1463 = vld [vmem:[#allocation6 + $0x48] sm:$0xff]
        %v1464 = vld [vmem:[#allocation6 + $0x50] sm:$0xff]
        %v1465 = vld [vmem:[#allocation6 + $0x58] sm:$0xff]
        %v1466 = vld [vmem:[#allocation6 + $0x60] sm:$0xff]
        %v1467 = vld [vmem:[#allocation6 + $0x68] sm:$0xff]
        %v1468 = vld [vmem:[#allocation6 + $0x70] sm:$0xff]
        %v1469 = vld [vmem:[#allocation6 + $0x78] sm:$0xff]
        %v1470 = vld [vmem:[%s8] sm:$0x3]
        %v1472 = vrot.slane %v1453, 7
        %1473 = vrot.lane.b32.xlu0 %v1472, 64
        %v1474 = vpop.permute.xlu0 %1473
        %v1476 = vperm.slane %v1470, 0
        %v1477 = vperm.slane %v1470, 1
        %v1480 = vsel %vm618, %v1474, 0
        %1482 = vmatpush.msra.mxu0 0.0
        %1483 = vmatpush.msra.mxu0 0.0
        %1484 = vmatpush.msra.mxu0 0.0
        %1485 = vmatpush.msra.mxu0 0.0
        %1486 = vmatpush.msra.mxu0 0.0
        %1487 = vmatpush.msra.mxu0 0.0
        %1488 = vmatpush.msra.mxu0 0.0
        %1489 = vmatpush.msra.mxu0 0.0
        %1490 = vmatpush.msra.mxu0 %v1468
        %1491 = vmatpush.msra.mxu0 %v1466
        %1492 = vmatpush.msra.mxu0 %v1464
        %1493 = vmatpush.msra.mxu0 %v1462
        %1494 = vmatpush.msra.mxu0 %v1460
        %1495 = vmatpush.msra.mxu0 %v1458
        %1496 = vmatpush.msra.mxu0 %v1456
        %1497 = vmatpush.msra.mxu0 %v1454
        %1498 = vmatmul.f32.gmra.mxu0 %v1480
        %v1499 = vpop.f32.mrf.mxu0
        %v1500 = vadd.f32 %v1476, %v1499
        %1501 = vdwg.mxu0
        %1502 = vmatpush.msra.mxu0 0.0
        %1503 = vmatpush.msra.mxu0 0.0
        %1504 = vmatpush.msra.mxu0 0.0
        %1505 = vmatpush.msra.mxu0 0.0
        %1506 = vmatpush.msra.mxu0 0.0
        %1507 = vmatpush.msra.mxu0 0.0
        %1508 = vmatpush.msra.mxu0 0.0
        %1509 = vmatpush.msra.mxu0 0.0
        %1510 = vmatpush.msra.mxu0 %v1469
        %1511 = vmatpush.msra.mxu0 %v1467
        %1512 = vmatpush.msra.mxu0 %v1465
        %1513 = vmatpush.msra.mxu0 %v1463
        %1514 = vmatpush.msra.mxu0 %v1461
        %1515 = vmatpush.msra.mxu0 %v1459
        %1516 = vmatpush.msra.mxu0 %v1457
        %1517 = vmatpush.msra.mxu0 %v1455
        %1518 = vmatmul.f32.gmra.mxu0 %v1480
        %v1519 = vpop.f32.mrf.mxu0
        %v1520 = vadd.f32 %v1477, %v1519
        %1521 = vdwg.mxu0
        %v1524 = vrot.slane %v1520, 7
        %vm1525 = vcmask 1040384
        %v1526 = vsel %vm1525, %v1500, %v1524
        %v1528 = vlaneseq
        %vm1529 = vcmp.ge.s32.totalorder %v1528, 0
        %vm1530 = vcmp.lt.s32.totalorder %v1528, 256
        %vm1531 = vmand %vm1529, %vm1530
        %1532 = vst.msk [vmem:[%s377] sm:$0x3] %vm1531, %v1526
        %p1533 = scmp.lt.s32.totalorder %s22, 3
        %s1534 = scalar_select %p1533, %s22, 3
        %s1535 = smul.addr %s1534, 2
        %s1536 = scalar_lea.vmem %s9, %s1535
        // Predicated region
        $region69: #{configure_model_forward.1} parent=55 // pred_check
          %p1537 = pneg %p234
        $region70: #{configure_model_forward.1} parent=55 // pred_check_branch
          %1539 = sbr.rel (%p1537) target = $region72
        $region71: #{configure_model_forward.1} parent=55 // pred_region
          _
        $region72: #{configure_model_forward.1} parent=55 // pred_fallthru
          _
      $region56: #{configure_model_forward.1} parent=5 // pred_fallthru
        _
      %p1540 = scmp.le.s32.totalorder 2, %s17
      // Predicated region
      $region73: #{configure_model_forward.1} parent=5 // pred_check
        %p1541 = pneg %p1540
      $region74: #{configure_model_forward.1} parent=5 // pred_check_branch
        %1543 = sbr.rel (%p1541) target = $region76
      $region75: #{configure_model_forward.1} parent=5 // pred_region
        %s1544 = ssub.s32 %s17, 2
        // Predicated region
        $region77: #{configure_model_forward.1} parent=75 // pred_check
          %p1545 = pneg %p240
        $region78: #{configure_model_forward.1} parent=75 // pred_check_branch
          %1547 = sbr.rel (%p1545) target = $region80
        $region79: #{configure_model_forward.1} parent=75 // pred_region
          %p1548 = scmp.lt.s32.totalorder %s23, 3
          %s1549 = scalar_select %p1548, %s23, 3
          %s1550 = smul.addr %s1549, 2
          %s1551 = scalar_lea.vmem %s9, %s1550
        $region80: #{configure_model_forward.1} parent=75 // pred_fallthru
          _
      $region76: #{configure_model_forward.1} parent=5 // pred_fallthru
        _
    $region6: #{configure_model_forward.1} parent=1 // loop_footer
      %s21 = sadd.s32 1, %s17
    $region7: #{configure_model_forward.1} parent=1 // loop_footer_branch
      %16 = sbr.rel target = $region3
    $region8: #{configure_model_forward.1} parent=1 // loop_exit
      _
    %1552 = vsyncpa [#allocation3], 1
    %s1553 = scalar_lea.sflag [#allocation3], 1
    %1554 = vsyncpa %s1553, 1
    %1555 = vsyncpa [#allocation5], 1

</llo_original>
